<compile_context>
chip_gen: v6e
topology: v6e:2x2x1
jax: 0.10.0
libtpu: 0.0.40
codegen_flags: <defaults>
</compile_context>

<pallas_src>
import functools
import math

import jax
import jax.numpy as jnp
from jax.experimental import pallas as pl
from jax.experimental.pallas import tpu as pltpu


def sampler_kernel(x_ref, w1_ref, b1_ref, w2_ref, b2_ref, mask_ref, out_ref):
    """One batch tile: layer-1 once, all K MC samples vectorized, one final store."""
    K, TB, H = mask_ref.shape
    C = w2_ref.shape[1]

    # ---- Layer 1: (TB, D) @ (D, H) with bf16 inputs, f32 MXU accumulation, + bias, ReLU.
    h = jnp.dot(x_ref[...], w1_ref[...], preferred_element_type=jnp.float32) + b1_ref[...]
    h = jnp.maximum(h, 0.0)                                      # (TB, H) f32

    # ---- All K MC-dropout samples in ONE matmul: (K*TB, H) @ (H, C).
    # masks are pre-scaled inverted-dropout masks (keep / (1-p)), exact in bf16.
    hk = (mask_ref[...] * h[None, :, :]).astype(jnp.bfloat16).reshape(K * TB, H)
    logits = jnp.dot(hk, w2_ref[...], preferred_element_type=jnp.float32) + b2_ref[...]

    # ---- Direct, numerically stable softmax (single exp pass), then sum probs over K
    #      in registers (no partial stores to the lane-sparse output block).
    m = jnp.max(logits, axis=-1, keepdims=True)
    e = jnp.exp(logits - m)                                      # (K*TB, C)
    s = jnp.sum(e, axis=-1, keepdims=True)
    probs = e / s                                                # exact divide (tolerance-safe)
    acc = jnp.sum(probs.reshape(K, TB, C), axis=0)               # (TB, C)

    # log(acc / K) == log(acc) - log(K); log(K) is a compile-time constant (no divide).
    out_ref[...] = jnp.log(acc) - jnp.float32(math.log(K))


@functools.partial(jax.jit, static_argnames=("k", "batch_tile"))
def sampler_model_forward(x_nchw, w1, b1, w2, b2, masks, *, k, batch_tile=16):
    B = x_nchw.shape[0]
    D = x_nchw.shape[1] * x_nchw.shape[2] * x_nchw.shape[3]
    H = w1.shape[1]
    C = w2.shape[1]
    assert B % batch_tile == 0, "batch must be a multiple of the batch tile"
    num_tiles = B // batch_tile

    # bf16 on the DMA path for the big operands; f32 for biases (added post-accumulate).
    x_flat = x_nchw.reshape(B, D).astype(jnp.bfloat16)
    w1_bf = w1.astype(jnp.bfloat16)
    w2_bf = w2.astype(jnp.bfloat16)
    b1_2d = b1.reshape(1, H).astype(jnp.float32)
    b2_2d = b2.reshape(1, C).astype(jnp.float32)
    masks_bf = masks.astype(jnp.bfloat16)          # {0, 1/(1-p)} -> exact in bf16 for p=0.5

    # Grid over batch tiles: weights use a constant index_map (DMA'd once, VMEM-resident),
    # x / masks / out stream through the default double-buffered pipeline.  The batch axis
    # is independent -> "parallel" lets v7x's two TensorCores split it.
    return pl.pallas_call(
        sampler_kernel,
        out_shape=jax.ShapeDtypeStruct((B, C), jnp.float32),
        grid=(num_tiles,),
        in_specs=[
            pl.BlockSpec((batch_tile, D), lambda i: (i, 0)),        # x tile (bf16)
            pl.BlockSpec((D, H), lambda i: (0, 0)),                 # W1 (bf16, resident)
            pl.BlockSpec((1, H), lambda i: (0, 0)),                 # b1 (f32, resident)
            pl.BlockSpec((H, C), lambda i: (0, 0)),                 # W2 (bf16, resident)
            pl.BlockSpec((1, C), lambda i: (0, 0)),                 # b2 (f32, resident)
            pl.BlockSpec((k, batch_tile, H), lambda i: (0, i, 0)),  # K dropout masks (bf16)
        ],
        out_specs=pl.BlockSpec((batch_tile, C), lambda i: (i, 0)),
        compiler_params=pltpu.CompilerParams(
            dimension_semantics=("parallel",),
        ),
    )(x_flat, w1_bf, b1_2d, w2_bf, b2_2d, masks_bf)


def reference_forward(x_nchw, w1, b1, w2, b2, masks, k):
    """Pure-JAX reference of the same math, with the same bf16 matmul inputs."""
    B = x_nchw.shape[0]
    x_flat = x_nchw.reshape(B, -1).astype(jnp.bfloat16)
    h = jnp.dot(x_flat, w1.astype(jnp.bfloat16), preferred_element_type=jnp.float32)
    h = jnp.maximum(h + b1.astype(jnp.float32), 0.0)                       # (B, H) f32
    hk = (masks.astype(jnp.bfloat16) * h[None, :, :]).astype(jnp.bfloat16)  # (K, B, H)
    logits = jnp.einsum("kbh,hc->kbc", hk, w2.astype(jnp.bfloat16),
                        preferred_element_type=jnp.float32) + b2            # (K, B, C)
    log_probs = jax.nn.log_softmax(logits, axis=-1)
    acc = jnp.sum(jnp.exp(log_probs), axis=0)                               # (B, C)
    return jnp.log(acc / k)


if __name__ == "__main__":
    # Small shapes consistent with the module: conv-style input (B, C, H, W), flattened MLP.
    B, C_in, HH, WW = 32, 4, 16, 16
    D = C_in * HH * WW          # 1024
    HID = 128                   # hidden width
    NUM_CLASSES = 16
    K = 8                       # number of MC-dropout samples
    DROP_P = 0.5
    BATCH_TILE = 16             # grid tiles the batch -> weights stay VMEM-resident

    key = jax.random.PRNGKey(0)
    kx, kw1, kb1, kw2, kb2, kmask = jax.random.split(key, 6)

    x = jax.random.normal(kx, (B, C_in, HH, WW), dtype=jnp.float32)
    w1 = jax.random.normal(kw1, (D, HID), dtype=jnp.float32) * (1.0 / jnp.sqrt(D))
    b1 = jax.random.normal(kb1, (HID,), dtype=jnp.float32) * 0.01
    w2 = jax.random.normal(kw2, (HID, NUM_CLASSES), dtype=jnp.float32) * (1.0 / jnp.sqrt(HID))
    b2 = jax.random.normal(kb2, (NUM_CLASSES,), dtype=jnp.float32) * 0.01

    # Deterministic MC-dropout masks (inverted dropout: keep / (1-p)), one per sample k.
    # For p=0.5 the values are exactly {0, 2.0}, hence lossless in bf16.
    keep = jax.random.bernoulli(kmask, 1.0 - DROP_P, (K, B, HID))
    masks = keep.astype(jnp.float32) / (1.0 - DROP_P)

    out = sampler_model_forward(x, w1, b1, w2, b2, masks, k=K, batch_tile=BATCH_TILE)
    out = jax.block_until_ready(out)

    ref = reference_forward(x, w1, b1, w2, b2, masks, K)
    assert out.shape == (B, NUM_CLASSES)
    assert jnp.allclose(out, ref, atol=2e-3, rtol=2e-3), "mismatch vs pure-JAX reference"

    print("KERNEL_OK")
</pallas_src>

<mosaic_0001>
module attributes {stable_mosaic.version = 11 : i64} {
  func.func @sampler_kernel(%arg0: i32, %arg1: memref<16x1024xbf16, #tpu.memory_space<vmem>>, %arg2: memref<1024x128xbf16, #tpu.memory_space<vmem>>, %arg3: memref<1x128xf32, #tpu.memory_space<vmem>>, %arg4: memref<128x16xbf16, #tpu.memory_space<vmem>>, %arg5: memref<1x16xf32, #tpu.memory_space<vmem>>, %arg6: memref<8x16x128xbf16, #tpu.memory_space<vmem>>, %arg7: memref<16x16xf32, #tpu.memory_space<vmem>>) attributes {dimension_semantics = [#tpu.dimension_semantics<parallel>], iteration_bounds = array<i64: 2>, scalar_prefetch = 0 : i64, scratch_operands = 0 : i64, tpu.core_type = #tpu.core_type<tc>, window_params = [{transform_indices = @transform_0, window_bounds = array<i64: 16, 1024>}, {pipeline_mode = #tpu.pipeline_mode<synchronous>, transform_indices = @transform_1, window_bounds = array<i64: 1024, 128>}, {pipeline_mode = #tpu.pipeline_mode<synchronous>, transform_indices = @transform_2, window_bounds = array<i64: 1, 128>}, {pipeline_mode = #tpu.pipeline_mode<synchronous>, transform_indices = @transform_3, window_bounds = array<i64: 128, 16>}, {pipeline_mode = #tpu.pipeline_mode<synchronous>, transform_indices = @transform_4, window_bounds = array<i64: 1, 16>}, {transform_indices = @transform_5, window_bounds = array<i64: 8, 16, 128>}, {transform_indices = @transform_6, window_bounds = array<i64: 16, 16>}]} {
    %c0 = arith.constant 0 : index
    %c0_0 = arith.constant 0 : index
    %0 = vector.load %arg1[%c0, %c0_0] : memref<16x1024xbf16, #tpu.memory_space<vmem>>, vector<16x1024xbf16>
    %c0_1 = arith.constant 0 : index
    %c0_2 = arith.constant 0 : index
    %1 = vector.load %arg2[%c0_1, %c0_2] : memref<1024x128xbf16, #tpu.memory_space<vmem>>, vector<1024x128xbf16>
    %cst = arith.constant dense<0.000000e+00> : vector<16x128xf32>
    %2 = tpu.matmul %0, %1, %cst {dimension_numbers = #tpu.dot_dimension_numbers<[1], [0], [0], [1], [0, 0, 1, 1], [], []>} : vector<16x1024xbf16>, vector<1024x128xbf16>, vector<16x128xf32> -> vector<16x128xf32>
    %c0_3 = arith.constant 0 : index
    %c0_4 = arith.constant 0 : index
    %3 = vector.load %arg3[%c0_3, %c0_4] : memref<1x128xf32, #tpu.memory_space<vmem>>, vector<1x128xf32>
    %4 = vector.broadcast %3 : vector<1x128xf32> to vector<16x128xf32>
    %5 = arith.addf %2, %4 : vector<16x128xf32>
    %cst_5 = arith.constant 0.000000e+00 : f32
    %6 = vector.broadcast %cst_5 : f32 to vector<16x128xf32>
    %7 = arith.maximumf %5, %6 : vector<16x128xf32>
    %c0_6 = arith.constant 0 : index
    %c0_7 = arith.constant 0 : index
    %c0_8 = arith.constant 0 : index
    %8 = vector.load %arg6[%c0_6, %c0_7, %c0_8] : memref<8x16x128xbf16, #tpu.memory_space<vmem>>, vector<8x16x128xbf16>
    %9 = vector.shape_cast %7 : vector<16x128xf32> to vector<1x16x128xf32>
    %10 = arith.extf %8 : vector<8x16x128xbf16> to vector<8x16x128xf32>
    %11 = vector.broadcast %9 : vector<1x16x128xf32> to vector<8x16x128xf32>
    %12 = arith.mulf %10, %11 : vector<8x16x128xf32>
    %13 = arith.truncf %12 : vector<8x16x128xf32> to vector<8x16x128xbf16>
    %14 = vector.shape_cast %13 : vector<8x16x128xbf16> to vector<128x128xbf16>
    %c0_9 = arith.constant 0 : index
    %c0_10 = arith.constant 0 : index
    %15 = vector.load %arg4[%c0_9, %c0_10] : memref<128x16xbf16, #tpu.memory_space<vmem>>, vector<128x16xbf16>
    %cst_11 = arith.constant dense<0.000000e+00> : vector<128x16xf32>
    %16 = tpu.matmul %14, %15, %cst_11 {dimension_numbers = #tpu.dot_dimension_numbers<[1], [0], [0], [1], [0, 0, 1, 1], [], []>} : vector<128x128xbf16>, vector<128x16xbf16>, vector<128x16xf32> -> vector<128x16xf32>
    %c0_12 = arith.constant 0 : index
    %c0_13 = arith.constant 0 : index
    %17 = vector.load %arg5[%c0_12, %c0_13] : memref<1x16xf32, #tpu.memory_space<vmem>>, vector<1x16xf32>
    %18 = vector.broadcast %17 : vector<1x16xf32> to vector<128x16xf32>
    %19 = arith.addf %16, %18 : vector<128x16xf32>
    %cst_14 = arith.constant dense<0xFF800000> : vector<128xf32>
    %20 = vector.multi_reduction <maximumf>, %19, %cst_14 [1] : vector<128x16xf32> to vector<128xf32>
    %21 = vector.shape_cast %20 : vector<128xf32> to vector<128x1xf32>
    %22 = vector.broadcast %21 : vector<128x1xf32> to vector<128x16xf32>
    %23 = arith.subf %19, %22 : vector<128x16xf32>
    %24 = math.exp %23 : vector<128x16xf32>
    %cst_15 = arith.constant dense<0.000000e+00> : vector<128xf32>
    %25 = vector.multi_reduction <add>, %24, %cst_15 [1] : vector<128x16xf32> to vector<128xf32>
    %26 = vector.shape_cast %25 : vector<128xf32> to vector<128x1xf32>
    %27 = vector.broadcast %26 : vector<128x1xf32> to vector<128x16xf32>
    %28 = arith.divf %24, %27 : vector<128x16xf32>
    %29 = vector.shape_cast %28 : vector<128x16xf32> to vector<8x16x16xf32>
    %cst_16 = arith.constant dense<0.000000e+00> : vector<16x16xf32>
    %30 = vector.multi_reduction <add>, %29, %cst_16 [0] : vector<8x16x16xf32> to vector<16x16xf32>
    %31 = math.log %30 : vector<16x16xf32>
    %cst_17 = arith.constant 2.07944155 : f32
    %32 = vector.broadcast %cst_17 : f32 to vector<16x16xf32>
    %33 = arith.subf %31, %32 : vector<16x16xf32>
    %c0_18 = arith.constant 0 : index
    %c0_19 = arith.constant 0 : index
    %34 = vector.load %arg7[%c0_18, %c0_19] : memref<16x16xf32, #tpu.memory_space<vmem>>, vector<16x16xf32>
    tpu.vector_store %arg7[%c0_18, %c0_19], %33 {strides = array<i32>} : memref<16x16xf32, #tpu.memory_space<vmem>>, vector<16x16xf32>,
    return
  }
  func.func @transform_0(%arg0: i32) -> (i32, i32) {
    %c0_i32 = arith.constant 0 : i32
    %c0_i32_0 = arith.constant 0 : i32
    return %arg0, %c0_i32 : i32, i32
  }
  func.func @transform_1(%arg0: i32) -> (i32, i32) {
    %c0_i32 = arith.constant 0 : i32
    %c0_i32_0 = arith.constant 0 : i32
    %c0_i32_1 = arith.constant 0 : i32
    return %c0_i32, %c0_i32_0 : i32, i32
  }
  func.func @transform_2(%arg0: i32) -> (i32, i32) {
    %c0_i32 = arith.constant 0 : i32
    %c0_i32_0 = arith.constant 0 : i32
    %c0_i32_1 = arith.constant 0 : i32
    return %c0_i32, %c0_i32_0 : i32, i32
  }
  func.func @transform_3(%arg0: i32) -> (i32, i32) {
    %c0_i32 = arith.constant 0 : i32
    %c0_i32_0 = arith.constant 0 : i32
    %c0_i32_1 = arith.constant 0 : i32
    return %c0_i32, %c0_i32_0 : i32, i32
  }
  func.func @transform_4(%arg0: i32) -> (i32, i32) {
    %c0_i32 = arith.constant 0 : i32
    %c0_i32_0 = arith.constant 0 : i32
    %c0_i32_1 = arith.constant 0 : i32
    return %c0_i32, %c0_i32_0 : i32, i32
  }
  func.func @transform_5(%arg0: i32) -> (i32, i32, i32) {
    %c0_i32 = arith.constant 0 : i32
    %c0_i32_0 = arith.constant 0 : i32
    %c0_i32_1 = arith.constant 0 : i32
    return %c0_i32, %arg0, %c0_i32_0 : i32, i32, i32
  }
  func.func @transform_6(%arg0: i32) -> (i32, i32) {
    %c0_i32 = arith.constant 0 : i32
    %c0_i32_0 = arith.constant 0 : i32
    return %arg0, %c0_i32 : i32, i32
  }
}

</mosaic_0001>

<llo_original>
// kernel: sampler_model_forward.1
$region0: #{sampler_model_forward.1}
  #allocation0 [shape = 'u32[]', space=smem, size = 0x4, offset = 0x4, fixed_abs, tag = 'smem constant byte address 0x4 - core index']
  #allocation1 [shape = 'u32[144,128]{1,0:T(1,128)}', space=vmem, size = 0x12000, scoped, tag = 'internal scratch']
  %s0 = inlined_call_operand.vmem [shape: bf16[32,1024], index: 0, kind: input, shape index: {}]
  %s1 = inlined_call_operand.vmem [shape: bf16[1024,128], index: 1, kind: input, shape index: {}]
  %s2 = inlined_call_operand.vmem [shape: f32[1,128], index: 2, kind: input, shape index: {}]
  %s3 = inlined_call_operand.vmem [shape: bf16[128,16], index: 3, kind: input, shape index: {}]
  %s4 = inlined_call_operand.vmem [shape: f32[1,16], index: 4, kind: input, shape index: {}]
  %s5 = inlined_call_operand.vmem [shape: bf16[8,32,128], index: 5, kind: input, shape index: {}]
  %s6 = inlined_call_operand.vmem [shape: f32[32,16], index: 6, kind: output, shape index: {}]
  %s7 = sld [smem:[#allocation0]]
  $region98: #{sampler_model_forward.1} parent=0
    _
  %s9 = ssub.s32 1, %s7
  %s10 = scalar_select 0, %s9, %s7
  $region1: #{sampler_model_forward.1} parent=0
    #allocation2 [shape = 'u8[65536]{0}', space=vmem, size = 0x10000, scoped, tag = 'input window, operand 5']
    loop: start=0, step=1, limit=4
    $region2: #{sampler_model_forward.1} parent=1 // loop_pre_header
      _
    $region3: #{sampler_model_forward.1} parent=1 // loop_header
      %s12 = sphi 0, %s16
      %p13 = scmp.ge.s32.totalorder %s12, 4
      %s22 = sphi 0, %s24
      %s25 = sphi 0, %s22
      %s26 = sphi 0, %s25
      %s42 = sphi 0, %s26
      %s46 = sphi 0, %s46
      %s48 = sphi 0, %s46
      %s49 = sphi 0, %s48
      %s63 = sphi 0, %s49
      %s67 = sphi 0, %s67
      %s69 = sphi 0, %s67
      %s70 = sphi 0, %s69
      %s84 = sphi 0, %s70
      %s88 = sphi 0, %s88
      %s90 = sphi 0, %s88
      %s91 = sphi 0, %s90
      %s105 = sphi 0, %s91
      %s109 = sphi 0, %s109
      %s111 = sphi 0, %s109
      %s112 = sphi 0, %s111
      %s126 = sphi 0, %s112
      %s132 = sphi 0, %s134
      %s135 = sphi 0, %s132
      %s136 = sphi 0, %s135
      %s152 = sphi 0, %s136
      %s158 = sphi 0, %s160
      %s161 = sphi 0, %s158
      %s162 = sphi 0, %s161
      %s178 = sphi 0, %s162
    $region4: #{sampler_model_forward.1} parent=1 // loop_header_branch
      %15 = sbr.rel (%p13) target = $region8
    $region5: #{sampler_model_forward.1} parent=1 // loop_body
      %s17 = ssub.s32 %s12, 1
      %s18 = ssub.s32 %s12, 2
      %s19 = sadd.s32 %s12, 1
      %s20 = ssub.s32 %s12, %s19
      %p21 = scmp.eq.s32.totalorder %s20, 0
      %s23 = sadd.s32 %s22, 1
      %s24 = scalar_select %p21, %s22, %s23
      %p27 = pneg %p21
      %p28 = scmp.eq.s32.totalorder %s12, 1
      %p29 = por %p27, %p28
      %p30 = scmp.ne.s32.totalorder %s22, %s25
      %p31 = scmp.eq.s32.totalorder %s12, 0
      %p32 = por %p30, %p31
      %p33 = scmp.ne.s32.totalorder %s22, %s25
      %p34 = scmp.eq.s32.totalorder %s17, 1
      %p35 = por %p33, %p34
      %p36 = scmp.ne.s32.totalorder %s25, %s26
      %p37 = scmp.eq.s32.totalorder %s17, 0
      %p38 = por %p36, %p37
      %p39 = scmp.ne.s32.totalorder %s25, %s26
      %p40 = scmp.eq.s32.totalorder %s18, 1
      %p41 = por %p39, %p40
      %p43 = scmp.ne.s32.totalorder %s26, %s42
      %p44 = scmp.eq.s32.totalorder %s18, 0
      %p45 = por %p43, %p44
      %s47 = sadd.s32 %s46, 1
      %p50 = scmp.eq.s32.totalorder %s12, 1
      %p51 = scmp.ne.s32.totalorder %s46, %s48
      %p52 = scmp.eq.s32.totalorder %s12, 0
      %p53 = por %p51, %p52
      %p54 = scmp.ne.s32.totalorder %s46, %s48
      %p55 = scmp.eq.s32.totalorder %s17, 1
      %p56 = por %p54, %p55
      %p57 = scmp.ne.s32.totalorder %s48, %s49
      %p58 = scmp.eq.s32.totalorder %s17, 0
      %p59 = por %p57, %p58
      %p60 = scmp.ne.s32.totalorder %s48, %s49
      %p61 = scmp.eq.s32.totalorder %s18, 1
      %p62 = por %p60, %p61
      %p64 = scmp.ne.s32.totalorder %s49, %s63
      %p65 = scmp.eq.s32.totalorder %s18, 0
      %p66 = por %p64, %p65
      %s68 = sadd.s32 %s67, 1
      %p71 = scmp.eq.s32.totalorder %s12, 1
      %p72 = scmp.ne.s32.totalorder %s67, %s69
      %p73 = scmp.eq.s32.totalorder %s12, 0
      %p74 = por %p72, %p73
      %p75 = scmp.ne.s32.totalorder %s67, %s69
      %p76 = scmp.eq.s32.totalorder %s17, 1
      %p77 = por %p75, %p76
      %p78 = scmp.ne.s32.totalorder %s69, %s70
      %p79 = scmp.eq.s32.totalorder %s17, 0
      %p80 = por %p78, %p79
      %p81 = scmp.ne.s32.totalorder %s69, %s70
      %p82 = scmp.eq.s32.totalorder %s18, 1
      %p83 = por %p81, %p82
      %p85 = scmp.ne.s32.totalorder %s70, %s84
      %p86 = scmp.eq.s32.totalorder %s18, 0
      %p87 = por %p85, %p86
      %s89 = sadd.s32 %s88, 1
      %p92 = scmp.eq.s32.totalorder %s12, 1
      %p93 = scmp.ne.s32.totalorder %s88, %s90
      %p94 = scmp.eq.s32.totalorder %s12, 0
      %p95 = por %p93, %p94
      %p96 = scmp.ne.s32.totalorder %s88, %s90
      %p97 = scmp.eq.s32.totalorder %s17, 1
      %p98 = por %p96, %p97
      %p99 = scmp.ne.s32.totalorder %s90, %s91
      %p100 = scmp.eq.s32.totalorder %s17, 0
      %p101 = por %p99, %p100
      %p102 = scmp.ne.s32.totalorder %s90, %s91
      %p103 = scmp.eq.s32.totalorder %s18, 1
      %p104 = por %p102, %p103
      %p106 = scmp.ne.s32.totalorder %s91, %s105
      %p107 = scmp.eq.s32.totalorder %s18, 0
      %p108 = por %p106, %p107
      %s110 = sadd.s32 %s109, 1
      %p113 = scmp.eq.s32.totalorder %s12, 1
      %p114 = scmp.ne.s32.totalorder %s109, %s111
      %p115 = scmp.eq.s32.totalorder %s12, 0
      %p116 = por %p114, %p115
      %p117 = scmp.ne.s32.totalorder %s109, %s111
      %p118 = scmp.eq.s32.totalorder %s17, 1
      %p119 = por %p117, %p118
      %p120 = scmp.ne.s32.totalorder %s111, %s112
      %p121 = scmp.eq.s32.totalorder %s17, 0
      %p122 = por %p120, %p121
      %p123 = scmp.ne.s32.totalorder %s111, %s112
      %p124 = scmp.eq.s32.totalorder %s18, 1
      %p125 = por %p123, %p124
      %p127 = scmp.ne.s32.totalorder %s112, %s126
      %p128 = scmp.eq.s32.totalorder %s18, 0
      %p129 = por %p127, %p128
      %s130 = ssub.s32 %s12, %s19
      %p131 = scmp.eq.s32.totalorder %s130, 0
      %s133 = sadd.s32 %s132, 1
      %s134 = scalar_select %p131, %s132, %s133
      %p137 = pneg %p131
      %p138 = scmp.eq.s32.totalorder %s12, 1
      %p139 = por %p137, %p138
      %p140 = scmp.ne.s32.totalorder %s132, %s135
      %p141 = scmp.eq.s32.totalorder %s12, 0
      %p142 = por %p140, %p141
      %p143 = scmp.ne.s32.totalorder %s132, %s135
      %p144 = scmp.eq.s32.totalorder %s17, 1
      %p145 = por %p143, %p144
      %p146 = scmp.ne.s32.totalorder %s135, %s136
      %p147 = scmp.eq.s32.totalorder %s17, 0
      %p148 = por %p146, %p147
      %p149 = scmp.ne.s32.totalorder %s135, %s136
      %p150 = scmp.eq.s32.totalorder %s18, 1
      %p151 = por %p149, %p150
      %p153 = scmp.ne.s32.totalorder %s136, %s152
      %p154 = scmp.eq.s32.totalorder %s18, 0
      %p155 = por %p153, %p154
      %s156 = ssub.s32 %s12, %s19
      %p157 = scmp.eq.s32.totalorder %s156, 0
      %s159 = sadd.s32 %s158, 1
      %s160 = scalar_select %p157, %s158, %s159
      %p163 = pneg %p157
      %p164 = scmp.eq.s32.totalorder %s12, 1
      %p165 = por %p163, %p164
      %p166 = scmp.ne.s32.totalorder %s158, %s161
      %p167 = scmp.eq.s32.totalorder %s12, 0
      %p168 = por %p166, %p167
      %p169 = scmp.ne.s32.totalorder %s158, %s161
      %p170 = scmp.eq.s32.totalorder %s17, 1
      %p171 = por %p169, %p170
      %p172 = scmp.ne.s32.totalorder %s161, %s162
      %p173 = scmp.eq.s32.totalorder %s17, 0
      %p174 = por %p172, %p173
      %p175 = scmp.ne.s32.totalorder %s161, %s162
      %p176 = scmp.eq.s32.totalorder %s18, 1
      %p177 = por %p175, %p176
      %p179 = scmp.ne.s32.totalorder %s162, %s178
      %p180 = scmp.eq.s32.totalorder %s18, 0
      %p181 = por %p179, %p180
      %p182 = scmp.le.s32.totalorder 1, %s12
      %p183 = scmp.lt.s32.totalorder %s12, 3
      %p184 = pnand %p182, %p183
      %p185 = pneg %p184
      // Predicated region
      $region9: #{sampler_model_forward.1} parent=5 // pred_check
        _
      $region10: #{sampler_model_forward.1} parent=5 // pred_check_branch
        %187 = sbr.rel (%p184) target = $region12
      $region11: #{sampler_model_forward.1} parent=5 // pred_region
        %s188 = ssub.s32 %s12, 1
        // Predicated region
        $region13: #{sampler_model_forward.1} parent=11 // pred_check
          %p189 = pneg %p59
        $region14: #{sampler_model_forward.1} parent=11 // pred_check_branch
          %191 = sbr.rel (%p189) target = $region16
        $region15: #{sampler_model_forward.1} parent=11 // pred_region
          _
        $region16: #{sampler_model_forward.1} parent=11 // pred_fallthru
          _
        // Predicated region
        $region17: #{sampler_model_forward.1} parent=11 // pred_check
          %p192 = pneg %p80
        $region18: #{sampler_model_forward.1} parent=11 // pred_check_branch
          %194 = sbr.rel (%p192) target = $region20
        $region19: #{sampler_model_forward.1} parent=11 // pred_region
          _
        $region20: #{sampler_model_forward.1} parent=11 // pred_fallthru
          _
        // Predicated region
        $region21: #{sampler_model_forward.1} parent=11 // pred_check
          %p195 = pneg %p101
        $region22: #{sampler_model_forward.1} parent=11 // pred_check_branch
          %197 = sbr.rel (%p195) target = $region24
        $region23: #{sampler_model_forward.1} parent=11 // pred_region
          _
        $region24: #{sampler_model_forward.1} parent=11 // pred_fallthru
          _
        // Predicated region
        $region25: #{sampler_model_forward.1} parent=11 // pred_check
          %p198 = pneg %p122
        $region26: #{sampler_model_forward.1} parent=11 // pred_check_branch
          %200 = sbr.rel (%p198) target = $region28
        $region27: #{sampler_model_forward.1} parent=11 // pred_region
          _
        $region28: #{sampler_model_forward.1} parent=11 // pred_fallthru
          _
      $region12: #{sampler_model_forward.1} parent=5 // pred_fallthru
        _
      %p201 = scmp.lt.s32.totalorder %s12, 2
      // Predicated region
      $region29: #{sampler_model_forward.1} parent=5 // pred_check
        %p202 = pneg %p201
      $region30: #{sampler_model_forward.1} parent=5 // pred_check_branch
        %204 = sbr.rel (%p202) target = $region32
      $region31: #{sampler_model_forward.1} parent=5 // pred_region
        // Predicated region
        $region33: #{sampler_model_forward.1} parent=31 // pred_check
          %p205 = pneg %p32
        $region34: #{sampler_model_forward.1} parent=31 // pred_check_branch
          %207 = sbr.rel (%p205) target = $region36
        $region35: #{sampler_model_forward.1} parent=31 // pred_region
          %s208 = smul.u32 2, %s12
          %p209 = scmp.lt.s32.totalorder %s208, 3
          %s210 = scalar_select %p209, %s208, 3
          %s211 = smul.addr %s210, 8
          %s212 = smul.addr %s211, 4
          %s213 = scalar_lea.vmem %s0, %s212
          %s214 = smul.u32 2, %s12
        $region36: #{sampler_model_forward.1} parent=31 // pred_fallthru
          _
        // Predicated region
        $region37: #{sampler_model_forward.1} parent=31 // pred_check
          %p215 = pneg %p142
        $region38: #{sampler_model_forward.1} parent=31 // pred_check_branch
          %217 = sbr.rel (%p215) target = $region40
        $region39: #{sampler_model_forward.1} parent=31 // pred_region
          %s218 = sand.u32 %s132, 1
          %s219 = sand.u32 %s132, 1
          %s220 = smul.addr %s219, 64
          %s221 = scalar_lea.vmem [#allocation2], %s220
          %s222 = smul.u32 2, %s12
          %s223 = smul.addr %s222, 4
          %s224 = scalar_lea.vmem %s5, %s223
          // Predicated region
          $region41: #{sampler_model_forward.1} parent=39 // pred_check
            _
          $region42: #{sampler_model_forward.1} parent=39 // pred_check_branch
            %226 = sbr.rel (0) target = $region44
          $region43: #{sampler_model_forward.1} parent=39 // pred_region
            // Predicated region
            $region45: #{sampler_model_forward.1} parent=43 // pred_check
              _
            $region46: #{sampler_model_forward.1} parent=43 // pred_check_branch
              %228 = sbr.rel target = $region48
            $region47: #{sampler_model_forward.1} parent=43 // pred_region
              // Predicated region
              $region60: #{sampler_model_forward.1} parent=47 // pred_check
                _
              $region61: #{sampler_model_forward.1} parent=47 // pred_check_branch
                %274 = sbr.rel (0) target = $region63
              $region62: #{sampler_model_forward.1} parent=47 // pred_region
                loop: start=0, step=1, limit=1
                $region64: #{sampler_model_forward.1} parent=62 // loop_pre_header
                  _
                $region65: #{sampler_model_forward.1} parent=62 // loop_header
                  %s276 = sphi 0, %s280
                  %p277 = scmp.ge.s32.totalorder %s276, 1
                  %s281 = sphi %s224, %s224
                  %s282 = sphi %s221, %s221
                $region66: #{sampler_model_forward.1} parent=62 // loop_header_branch
                  %279 = sbr.rel (%p277) target = $region70
                $region67: #{sampler_model_forward.1} parent=62 // loop_body
                  _
                $region68: #{sampler_model_forward.1} parent=62 // loop_footer
                  %s280 = sadd.s32 1, %s276
                $region69: #{sampler_model_forward.1} parent=62 // loop_footer_branch
                  %275 = sbr.rel target = $region65
                $region70: #{sampler_model_forward.1} parent=62 // loop_exit
                  _
                %s284 = ssub.s32 16, 1
                loop: start=0, step=1, limit=1
                $region71: #{sampler_model_forward.1} parent=62 // loop_pre_header
                  _
                $region72: #{sampler_model_forward.1} parent=62 // loop_header
                  %s286 = sphi 0, %s290
                  %p287 = scmp.ge.s32.totalorder %s286, 1
                  %s291 = sphi %s224, %s224
                  %s292 = sphi %s221, %s221
                $region73: #{sampler_model_forward.1} parent=62 // loop_header_branch
                  %289 = sbr.rel (%p287) target = $region77
                $region74: #{sampler_model_forward.1} parent=62 // loop_body
                  %v293 = vld [vmem:[%s291] sm:%s284]
                  %294 = vst [vmem:[%s292] sm:%s284] %v293
                  %v295 = vld [vmem:[%s291 + $0x4] sm:%s284]
                  %296 = vst [vmem:[%s292 + $0x4] sm:%s284] %v295
                  %v297 = vld [vmem:[%s291 + $0x10] sm:%s284]
                  %298 = vst [vmem:[%s292 + $0x8] sm:%s284] %v297
                  %v299 = vld [vmem:[%s291 + $0x14] sm:%s284]
                  %300 = vst [vmem:[%s292 + $0xc] sm:%s284] %v299
                  %v301 = vld [vmem:[%s291 + $0x20] sm:%s284]
                  %302 = vst [vmem:[%s292 + $0x10] sm:%s284] %v301
                  %v303 = vld [vmem:[%s291 + $0x24] sm:%s284]
                  %304 = vst [vmem:[%s292 + $0x14] sm:%s284] %v303
                  %v305 = vld [vmem:[%s291 + $0x30] sm:%s284]
                  %306 = vst [vmem:[%s292 + $0x18] sm:%s284] %v305
                  %v307 = vld [vmem:[%s291 + $0x34] sm:%s284]
                  %308 = vst [vmem:[%s292 + $0x1c] sm:%s284] %v307
                  %v309 = vld [vmem:[%s291 + $0x40] sm:%s284]
                  %310 = vst [vmem:[%s292 + $0x20] sm:%s284] %v309
                  %v311 = vld [vmem:[%s291 + $0x44] sm:%s284]
                  %312 = vst [vmem:[%s292 + $0x24] sm:%s284] %v311
                  %v313 = vld [vmem:[%s291 + $0x50] sm:%s284]
                  %314 = vst [vmem:[%s292 + $0x28] sm:%s284] %v313
                  %v315 = vld [vmem:[%s291 + $0x54] sm:%s284]
                  %316 = vst [vmem:[%s292 + $0x2c] sm:%s284] %v315
                  %v317 = vld [vmem:[%s291 + $0x60] sm:%s284]
                  %318 = vst [vmem:[%s292 + $0x30] sm:%s284] %v317
                  %v319 = vld [vmem:[%s291 + $0x64] sm:%s284]
                  %320 = vst [vmem:[%s292 + $0x34] sm:%s284] %v319
                  %v321 = vld [vmem:[%s291 + $0x70] sm:%s284]
                  %322 = vst [vmem:[%s292 + $0x38] sm:%s284] %v321
                  %v323 = vld [vmem:[%s291 + $0x74] sm:%s284]
                  %324 = vst [vmem:[%s292 + $0x3c] sm:%s284] %v323
                $region75: #{sampler_model_forward.1} parent=62 // loop_footer
                  %s290 = sadd.s32 1, %s286
                $region76: #{sampler_model_forward.1} parent=62 // loop_footer_branch
                  %285 = sbr.rel target = $region72
                $region77: #{sampler_model_forward.1} parent=62 // loop_exit
                  _
              $region63: #{sampler_model_forward.1} parent=47 // pred_fallthru
                _
            $region48: #{sampler_model_forward.1} parent=43 // pred_fallthru
              _
            // Predicated region
            $region49: #{sampler_model_forward.1} parent=43 // pred_check
              _
            $region50: #{sampler_model_forward.1} parent=43 // pred_check_branch
              %230 = sbr.rel (0) target = $region52
            $region51: #{sampler_model_forward.1} parent=43 // pred_region
              %s232 = ssub.s32 16, 1
              loop: start=0, step=1, limit=1
              $region53: #{sampler_model_forward.1} parent=51 // loop_pre_header
                _
              $region54: #{sampler_model_forward.1} parent=51 // loop_header
                %s234 = sphi 0, %s238
                %p235 = scmp.ge.s32.totalorder %s234, 1
                %s239 = sphi %s224, %s224
                %s240 = sphi %s221, %s221
              $region55: #{sampler_model_forward.1} parent=51 // loop_header_branch
                %237 = sbr.rel (%p235) target = $region59
              $region56: #{sampler_model_forward.1} parent=51 // loop_body
                %v241 = vld [vmem:[%s239] sm:%s232]
                %242 = vst [vmem:[%s240] sm:%s232] %v241
                %v243 = vld [vmem:[%s239 + $0x4] sm:%s232]
                %244 = vst [vmem:[%s240 + $0x4] sm:%s232] %v243
                %v245 = vld [vmem:[%s239 + $0x10] sm:%s232]
                %246 = vst [vmem:[%s240 + $0x8] sm:%s232] %v245
                %v247 = vld [vmem:[%s239 + $0x14] sm:%s232]
                %248 = vst [vmem:[%s240 + $0xc] sm:%s232] %v247
                %v249 = vld [vmem:[%s239 + $0x20] sm:%s232]
                %250 = vst [vmem:[%s240 + $0x10] sm:%s232] %v249
                %v251 = vld [vmem:[%s239 + $0x24] sm:%s232]
                %252 = vst [vmem:[%s240 + $0x14] sm:%s232] %v251
                %v253 = vld [vmem:[%s239 + $0x30] sm:%s232]
                %254 = vst [vmem:[%s240 + $0x18] sm:%s232] %v253
                %v255 = vld [vmem:[%s239 + $0x34] sm:%s232]
                %256 = vst [vmem:[%s240 + $0x1c] sm:%s232] %v255
                %v257 = vld [vmem:[%s239 + $0x40] sm:%s232]
                %258 = vst [vmem:[%s240 + $0x20] sm:%s232] %v257
                %v259 = vld [vmem:[%s239 + $0x44] sm:%s232]
                %260 = vst [vmem:[%s240 + $0x24] sm:%s232] %v259
                %v261 = vld [vmem:[%s239 + $0x50] sm:%s232]
                %262 = vst [vmem:[%s240 + $0x28] sm:%s232] %v261
                %v263 = vld [vmem:[%s239 + $0x54] sm:%s232]
                %264 = vst [vmem:[%s240 + $0x2c] sm:%s232] %v263
                %v265 = vld [vmem:[%s239 + $0x60] sm:%s232]
                %266 = vst [vmem:[%s240 + $0x30] sm:%s232] %v265
                %v267 = vld [vmem:[%s239 + $0x64] sm:%s232]
                %268 = vst [vmem:[%s240 + $0x34] sm:%s232] %v267
                %v269 = vld [vmem:[%s239 + $0x70] sm:%s232]
                %270 = vst [vmem:[%s240 + $0x38] sm:%s232] %v269
                %v271 = vld [vmem:[%s239 + $0x74] sm:%s232]
                %272 = vst [vmem:[%s240 + $0x3c] sm:%s232] %v271
              $region57: #{sampler_model_forward.1} parent=51 // loop_footer
                %s238 = sadd.s32 1, %s234
              $region58: #{sampler_model_forward.1} parent=51 // loop_footer_branch
                %233 = sbr.rel target = $region54
              $region59: #{sampler_model_forward.1} parent=51 // loop_exit
                _
            $region52: #{sampler_model_forward.1} parent=43 // pred_fallthru
              _
          $region44: #{sampler_model_forward.1} parent=39 // pred_fallthru
            _
          %325 = vnop
        $region40: #{sampler_model_forward.1} parent=31 // pred_fallthru
          _
      $region32: #{sampler_model_forward.1} parent=5 // pred_fallthru
        _
      %p326 = scmp.le.s32.totalorder 1, %s12
      %p327 = scmp.lt.s32.totalorder %s12, 3
      %p328 = pnand %p326, %p327
      %p329 = pneg %p328
      // Predicated region
      $region78: #{sampler_model_forward.1} parent=5 // pred_check
        _
      $region79: #{sampler_model_forward.1} parent=5 // pred_check_branch
        %331 = sbr.rel (%p328) target = $region81
      $region80: #{sampler_model_forward.1} parent=5 // pred_region
        %s332 = ssub.s32 %s12, 1
        %s333 = sand.u32 %s135, 1
        %s334 = sand.u32 %s135, 1
        %s335 = smul.addr %s334, 64
        %s336 = scalar_lea.vmem [#allocation2], %s335
        // Predicated region
        $region82: #{sampler_model_forward.1} parent=80 // pred_check
          %p337 = pneg %p148
        $region83: #{sampler_model_forward.1} parent=80 // pred_check_branch
          %339 = sbr.rel (%p337) target = $region85
        $region84: #{sampler_model_forward.1} parent=80 // pred_region
          _
        $region85: #{sampler_model_forward.1} parent=80 // pred_fallthru
          _
        %s340 = smul.u32 2, %s17
        %p341 = scmp.lt.s32.totalorder %s340, 3
        %s342 = scalar_select %p341, %s340, 3
        %s343 = smul.addr %s342, 8
        %s344 = smul.addr %s343, 4
        %s345 = scalar_lea.vmem %s0, %s344
        %p346 = pneg %p38
        %p347 = pneg %p35
        %p348 = pneg %p59
        %p349 = pneg %p56
        %p350 = pneg %p80
        %p351 = pneg %p77
        %p352 = pneg %p101
        %p353 = pneg %p98
        %p354 = pneg %p122
        %p355 = pneg %p119
        %s356 = sand.u32 %s135, 1
        %s357 = sand.u32 %s135, 1
        %s358 = smul.addr %s357, 64
        %s359 = scalar_lea.vmem [#allocation2], %s358
        %p360 = pneg %p148
        %p361 = pneg %p145
        %p362 = pneg %p174
        %p363 = pneg %p171
        %s364 = smul.u32 2, %s17
        %p365 = scmp.lt.s32.totalorder %s364, 3
        %s366 = scalar_select %p365, %s364, 3
        %s367 = smul.addr %s366, 8
        %s368 = scalar_lea.vmem %s6, %s367
        %s369 = smul.u32 2, %s17
        %p370 = scmp.lt.s32.totalorder %s369, 3
        %s371 = scalar_select %p370, %s369, 3
        %s372 = smul.addr %s371, 8
        %s373 = smul.addr %s372, 4
        %s374 = scalar_lea.vmem %s0, %s373
        %s375 = smul.u32 2, %s17
        %s376 = smul.u32 2, %s17
        %s377 = smul.u32 2, %s17
        %p378 = scmp.lt.s32.totalorder %s377, 3
        %s379 = scalar_select %p378, %s377, 3
        %s380 = smul.addr %s379, 8
        %s381 = scalar_lea.vmem %s6, %s380
        %s382 = smul.u32 2, %s17
        %v384 = vld [vmem:[%s374] sm:$0xff]
        %v385 = vld [vmem:[%s374 + $0x8] sm:$0xff]
        %v386 = vld [vmem:[%s374 + $0x10] sm:$0xff]
        %v387 = vld [vmem:[%s374 + $0x18] sm:$0xff]
        %v388 = vld [vmem:[%s374 + $0x20] sm:$0xff]
        %v389 = vld [vmem:[%s374 + $0x28] sm:$0xff]
        %v390 = vld [vmem:[%s374 + $0x30] sm:$0xff]
        %v391 = vld [vmem:[%s374 + $0x38] sm:$0xff]
        %v392 = vld [vmem:[%s1] sm:$0xf]
        %v393 = vld [vmem:[%s1 + $0x4] sm:$0xf]
        %v394 = vld [vmem:[%s1 + $0x8] sm:$0xf]
        %v395 = vld [vmem:[%s1 + $0xc] sm:$0xf]
        %v396 = vld [vmem:[%s1 + $0x10] sm:$0xf]
        %v397 = vld [vmem:[%s1 + $0x14] sm:$0xf]
        %v398 = vld [vmem:[%s1 + $0x18] sm:$0xf]
        %v399 = vld [vmem:[%s1 + $0x1c] sm:$0xf]
        %v400 = vld [vmem:[%s1 + $0x20] sm:$0xf]
        %v401 = vld [vmem:[%s1 + $0x24] sm:$0xf]
        %v402 = vld [vmem:[%s1 + $0x28] sm:$0xf]
        %v403 = vld [vmem:[%s1 + $0x2c] sm:$0xf]
        %v404 = vld [vmem:[%s1 + $0x30] sm:$0xf]
        %v405 = vld [vmem:[%s1 + $0x34] sm:$0xf]
        %v406 = vld [vmem:[%s1 + $0x38] sm:$0xf]
        %v407 = vld [vmem:[%s1 + $0x3c] sm:$0xf]
        %v408 = vld [vmem:[%s1 + $0x40] sm:$0xf]
        %v409 = vld [vmem:[%s1 + $0x44] sm:$0xf]
        %v410 = vld [vmem:[%s1 + $0x48] sm:$0xf]
        %v411 = vld [vmem:[%s1 + $0x4c] sm:$0xf]
        %v412 = vld [vmem:[%s1 + $0x50] sm:$0xf]
        %v413 = vld [vmem:[%s1 + $0x54] sm:$0xf]
        %v414 = vld [vmem:[%s1 + $0x58] sm:$0xf]
        %v415 = vld [vmem:[%s1 + $0x5c] sm:$0xf]
        %v416 = vld [vmem:[%s1 + $0x60] sm:$0xf]
        %v417 = vld [vmem:[%s1 + $0x64] sm:$0xf]
        %v418 = vld [vmem:[%s1 + $0x68] sm:$0xf]
        %v419 = vld [vmem:[%s1 + $0x6c] sm:$0xf]
        %v420 = vld [vmem:[%s1 + $0x70] sm:$0xf]
        %v421 = vld [vmem:[%s1 + $0x74] sm:$0xf]
        %v422 = vld [vmem:[%s1 + $0x78] sm:$0xf]
        %v423 = vld [vmem:[%s1 + $0x7c] sm:$0xf]
        %v424 = vld [vmem:[%s1 + $0x80] sm:$0xf]
        %v425 = vld [vmem:[%s1 + $0x84] sm:$0xf]
        %v426 = vld [vmem:[%s1 + $0x88] sm:$0xf]
        %v427 = vld [vmem:[%s1 + $0x8c] sm:$0xf]
        %v428 = vld [vmem:[%s1 + $0x90] sm:$0xf]
        %v429 = vld [vmem:[%s1 + $0x94] sm:$0xf]
        %v430 = vld [vmem:[%s1 + $0x98] sm:$0xf]
        %v431 = vld [vmem:[%s1 + $0x9c] sm:$0xf]
        %v432 = vld [vmem:[%s1 + $0xa0] sm:$0xf]
        %v433 = vld [vmem:[%s1 + $0xa4] sm:$0xf]
        %v434 = vld [vmem:[%s1 + $0xa8] sm:$0xf]
        %v435 = vld [vmem:[%s1 + $0xac] sm:$0xf]
        %v436 = vld [vmem:[%s1 + $0xb0] sm:$0xf]
        %v437 = vld [vmem:[%s1 + $0xb4] sm:$0xf]
        %v438 = vld [vmem:[%s1 + $0xb8] sm:$0xf]
        %v439 = vld [vmem:[%s1 + $0xbc] sm:$0xf]
        %v440 = vld [vmem:[%s1 + $0xc0] sm:$0xf]
        %v441 = vld [vmem:[%s1 + $0xc4] sm:$0xf]
        %v442 = vld [vmem:[%s1 + $0xc8] sm:$0xf]
        %v443 = vld [vmem:[%s1 + $0xcc] sm:$0xf]
        %v444 = vld [vmem:[%s1 + $0xd0] sm:$0xf]
        %v445 = vld [vmem:[%s1 + $0xd4] sm:$0xf]
        %v446 = vld [vmem:[%s1 + $0xd8] sm:$0xf]
        %v447 = vld [vmem:[%s1 + $0xdc] sm:$0xf]
        %v448 = vld [vmem:[%s1 + $0xe0] sm:$0xf]
        %v449 = vld [vmem:[%s1 + $0xe4] sm:$0xf]
        %v450 = vld [vmem:[%s1 + $0xe8] sm:$0xf]
        %v451 = vld [vmem:[%s1 + $0xec] sm:$0xf]
        %v452 = vld [vmem:[%s1 + $0xf0] sm:$0xf]
        %v453 = vld [vmem:[%s1 + $0xf4] sm:$0xf]
        %v454 = vld [vmem:[%s1 + $0xf8] sm:$0xf]
        %v455 = vld [vmem:[%s1 + $0xfc] sm:$0xf]
        %v456 = vld [vmem:[%s1 + $0x100] sm:$0xf]
        %v457 = vld [vmem:[%s1 + $0x104] sm:$0xf]
        %v458 = vld [vmem:[%s1 + $0x108] sm:$0xf]
        %v459 = vld [vmem:[%s1 + $0x10c] sm:$0xf]
        %v460 = vld [vmem:[%s1 + $0x110] sm:$0xf]
        %v461 = vld [vmem:[%s1 + $0x114] sm:$0xf]
        %v462 = vld [vmem:[%s1 + $0x118] sm:$0xf]
        %v463 = vld [vmem:[%s1 + $0x11c] sm:$0xf]
        %v464 = vld [vmem:[%s1 + $0x120] sm:$0xf]
        %v465 = vld [vmem:[%s1 + $0x124] sm:$0xf]
        %v466 = vld [vmem:[%s1 + $0x128] sm:$0xf]
        %v467 = vld [vmem:[%s1 + $0x12c] sm:$0xf]
        %v468 = vld [vmem:[%s1 + $0x130] sm:$0xf]
        %v469 = vld [vmem:[%s1 + $0x134] sm:$0xf]
        %v470 = vld [vmem:[%s1 + $0x138] sm:$0xf]
        %v471 = vld [vmem:[%s1 + $0x13c] sm:$0xf]
        %v472 = vld [vmem:[%s1 + $0x140] sm:$0xf]
        %v473 = vld [vmem:[%s1 + $0x144] sm:$0xf]
        %v474 = vld [vmem:[%s1 + $0x148] sm:$0xf]
        %v475 = vld [vmem:[%s1 + $0x14c] sm:$0xf]
        %v476 = vld [vmem:[%s1 + $0x150] sm:$0xf]
        %v477 = vld [vmem:[%s1 + $0x154] sm:$0xf]
        %v478 = vld [vmem:[%s1 + $0x158] sm:$0xf]
        %v479 = vld [vmem:[%s1 + $0x15c] sm:$0xf]
        %v480 = vld [vmem:[%s1 + $0x160] sm:$0xf]
        %v481 = vld [vmem:[%s1 + $0x164] sm:$0xf]
        %v482 = vld [vmem:[%s1 + $0x168] sm:$0xf]
        %v483 = vld [vmem:[%s1 + $0x16c] sm:$0xf]
        %v484 = vld [vmem:[%s1 + $0x170] sm:$0xf]
        %v485 = vld [vmem:[%s1 + $0x174] sm:$0xf]
        %v486 = vld [vmem:[%s1 + $0x178] sm:$0xf]
        %v487 = vld [vmem:[%s1 + $0x17c] sm:$0xf]
        %v488 = vld [vmem:[%s1 + $0x180] sm:$0xf]
        %v489 = vld [vmem:[%s1 + $0x184] sm:$0xf]
        %v490 = vld [vmem:[%s1 + $0x188] sm:$0xf]
        %v491 = vld [vmem:[%s1 + $0x18c] sm:$0xf]
        %v492 = vld [vmem:[%s1 + $0x190] sm:$0xf]
        %v493 = vld [vmem:[%s1 + $0x194] sm:$0xf]
        %v494 = vld [vmem:[%s1 + $0x198] sm:$0xf]
        %v495 = vld [vmem:[%s1 + $0x19c] sm:$0xf]
        %v496 = vld [vmem:[%s1 + $0x1a0] sm:$0xf]
        %v497 = vld [vmem:[%s1 + $0x1a4] sm:$0xf]
        %v498 = vld [vmem:[%s1 + $0x1a8] sm:$0xf]
        %v499 = vld [vmem:[%s1 + $0x1ac] sm:$0xf]
        %v500 = vld [vmem:[%s1 + $0x1b0] sm:$0xf]
        %v501 = vld [vmem:[%s1 + $0x1b4] sm:$0xf]
        %v502 = vld [vmem:[%s1 + $0x1b8] sm:$0xf]
        %v503 = vld [vmem:[%s1 + $0x1bc] sm:$0xf]
        %v504 = vld [vmem:[%s1 + $0x1c0] sm:$0xf]
        %v505 = vld [vmem:[%s1 + $0x1c4] sm:$0xf]
        %v506 = vld [vmem:[%s1 + $0x1c8] sm:$0xf]
        %v507 = vld [vmem:[%s1 + $0x1cc] sm:$0xf]
        %v508 = vld [vmem:[%s1 + $0x1d0] sm:$0xf]
        %v509 = vld [vmem:[%s1 + $0x1d4] sm:$0xf]
        %v510 = vld [vmem:[%s1 + $0x1d8] sm:$0xf]
        %v511 = vld [vmem:[%s1 + $0x1dc] sm:$0xf]
        %v512 = vld [vmem:[%s1 + $0x1e0] sm:$0xf]
        %v513 = vld [vmem:[%s1 + $0x1e4] sm:$0xf]
        %v514 = vld [vmem:[%s1 + $0x1e8] sm:$0xf]
        %v515 = vld [vmem:[%s1 + $0x1ec] sm:$0xf]
        %v516 = vld [vmem:[%s1 + $0x1f0] sm:$0xf]
        %v517 = vld [vmem:[%s1 + $0x1f4] sm:$0xf]
        %v518 = vld [vmem:[%s1 + $0x1f8] sm:$0xf]
        %v519 = vld [vmem:[%s1 + $0x1fc] sm:$0xf]
        %v520 = vld [vmem:[%s2] sm:$0x1]
        %v522 = vlaneseq
        %v523 = vshrl.u32 %v522, 7
        %v524 = vsub.s32 0, %v523
        %v525 = vrot.slane %v520, %v524
        %v535 = vunpack.c.l.b16 %v384
        %v536 = vunpack.c.h.b16 %v384
        %v537 = vunpack.c.l.b16 %v385
        %v538 = vunpack.c.h.b16 %v385
        %v539 = vunpack.c.l.b16 %v386
        %v540 = vunpack.c.h.b16 %v386
        %v541 = vunpack.c.l.b16 %v387
        %v542 = vunpack.c.h.b16 %v387
        %v543 = vunpack.c.l.b16 %v388
        %v544 = vunpack.c.h.b16 %v388
        %v545 = vunpack.c.l.b16 %v389
        %v546 = vunpack.c.h.b16 %v389
        %v547 = vunpack.c.l.b16 %v390
        %v548 = vunpack.c.h.b16 %v390
        %v549 = vunpack.c.l.b16 %v391
        %v550 = vunpack.c.h.b16 %v391
        %v551 = vpack.c.b16 %v543, %v535
        %v552 = vpack.c.b16 %v544, %v536
        %v553 = vpack.c.b16 %v545, %v537
        %v554 = vpack.c.b16 %v546, %v538
        %v555 = vpack.c.b16 %v547, %v539
        %v556 = vpack.c.b16 %v548, %v540
        %v557 = vpack.c.b16 %v549, %v541
        %v558 = vpack.c.b16 %v550, %v542
        %v695 = vunpack.c.l.b16 %v392
        %v696 = vunpack.c.l.b16 %v393
        %v697 = vunpack.c.l.b16 %v394
        %v698 = vunpack.c.l.b16 %v395
        %v699 = vunpack.c.l.b16 %v396
        %v700 = vunpack.c.l.b16 %v397
        %v701 = vunpack.c.l.b16 %v398
        %v702 = vunpack.c.l.b16 %v399
        %v703 = vunpack.c.l.b16 %v400
        %v704 = vunpack.c.l.b16 %v401
        %v705 = vunpack.c.l.b16 %v402
        %v706 = vunpack.c.l.b16 %v403
        %v707 = vunpack.c.l.b16 %v404
        %v708 = vunpack.c.l.b16 %v405
        %v709 = vunpack.c.l.b16 %v406
        %v710 = vunpack.c.l.b16 %v407
        %v711 = vunpack.c.l.b16 %v408
        %v712 = vunpack.c.l.b16 %v409
        %v713 = vunpack.c.l.b16 %v410
        %v714 = vunpack.c.l.b16 %v411
        %v715 = vunpack.c.l.b16 %v412
        %v716 = vunpack.c.l.b16 %v413
        %v717 = vunpack.c.l.b16 %v414
        %v718 = vunpack.c.l.b16 %v415
        %v719 = vunpack.c.l.b16 %v416
        %v720 = vunpack.c.l.b16 %v417
        %v721 = vunpack.c.l.b16 %v418
        %v722 = vunpack.c.l.b16 %v419
        %v723 = vunpack.c.l.b16 %v420
        %v724 = vunpack.c.l.b16 %v421
        %v725 = vunpack.c.l.b16 %v422
        %v726 = vunpack.c.l.b16 %v423
        %v727 = vunpack.c.l.b16 %v424
        %v728 = vunpack.c.l.b16 %v425
        %v729 = vunpack.c.l.b16 %v426
        %v730 = vunpack.c.l.b16 %v427
        %v731 = vunpack.c.l.b16 %v428
        %v732 = vunpack.c.l.b16 %v429
        %v733 = vunpack.c.l.b16 %v430
        %v734 = vunpack.c.l.b16 %v431
        %v735 = vunpack.c.l.b16 %v432
        %v736 = vunpack.c.l.b16 %v433
        %v737 = vunpack.c.l.b16 %v434
        %v738 = vunpack.c.l.b16 %v435
        %v739 = vunpack.c.l.b16 %v436
        %v740 = vunpack.c.l.b16 %v437
        %v741 = vunpack.c.l.b16 %v438
        %v742 = vunpack.c.l.b16 %v439
        %v743 = vunpack.c.l.b16 %v440
        %v744 = vunpack.c.l.b16 %v441
        %v745 = vunpack.c.l.b16 %v442
        %v746 = vunpack.c.l.b16 %v443
        %v747 = vunpack.c.l.b16 %v444
        %v748 = vunpack.c.l.b16 %v445
        %v749 = vunpack.c.l.b16 %v446
        %v750 = vunpack.c.l.b16 %v447
        %v751 = vunpack.c.l.b16 %v448
        %v752 = vunpack.c.l.b16 %v449
        %v753 = vunpack.c.l.b16 %v450
        %v754 = vunpack.c.l.b16 %v451
        %v755 = vunpack.c.l.b16 %v452
        %v756 = vunpack.c.l.b16 %v453
        %v757 = vunpack.c.l.b16 %v454
        %v758 = vunpack.c.l.b16 %v455
        %v759 = vunpack.c.l.b16 %v456
        %v760 = vunpack.c.l.b16 %v457
        %v761 = vunpack.c.l.b16 %v458
        %v762 = vunpack.c.l.b16 %v459
        %v763 = vunpack.c.l.b16 %v460
        %v764 = vunpack.c.l.b16 %v461
        %v765 = vunpack.c.l.b16 %v462
        %v766 = vunpack.c.l.b16 %v463
        %v767 = vunpack.c.l.b16 %v464
        %v768 = vunpack.c.l.b16 %v465
        %v769 = vunpack.c.l.b16 %v466
        %v770 = vunpack.c.l.b16 %v467
        %v771 = vunpack.c.l.b16 %v468
        %v772 = vunpack.c.l.b16 %v469
        %v773 = vunpack.c.l.b16 %v470
        %v774 = vunpack.c.l.b16 %v471
        %v775 = vunpack.c.l.b16 %v472
        %v776 = vunpack.c.l.b16 %v473
        %v777 = vunpack.c.l.b16 %v474
        %v778 = vunpack.c.l.b16 %v475
        %v779 = vunpack.c.l.b16 %v476
        %v780 = vunpack.c.l.b16 %v477
        %v781 = vunpack.c.l.b16 %v478
        %v782 = vunpack.c.l.b16 %v479
        %v783 = vunpack.c.l.b16 %v480
        %v784 = vunpack.c.l.b16 %v481
        %v785 = vunpack.c.l.b16 %v482
        %v786 = vunpack.c.l.b16 %v483
        %v787 = vunpack.c.l.b16 %v484
        %v788 = vunpack.c.l.b16 %v485
        %v789 = vunpack.c.l.b16 %v486
        %v790 = vunpack.c.l.b16 %v487
        %v791 = vunpack.c.l.b16 %v488
        %v792 = vunpack.c.l.b16 %v489
        %v793 = vunpack.c.l.b16 %v490
        %v794 = vunpack.c.l.b16 %v491
        %v795 = vunpack.c.l.b16 %v492
        %v796 = vunpack.c.l.b16 %v493
        %v797 = vunpack.c.l.b16 %v494
        %v798 = vunpack.c.l.b16 %v495
        %v799 = vunpack.c.l.b16 %v496
        %v800 = vunpack.c.l.b16 %v497
        %v801 = vunpack.c.l.b16 %v498
        %v802 = vunpack.c.l.b16 %v499
        %v803 = vunpack.c.l.b16 %v500
        %v804 = vunpack.c.l.b16 %v501
        %v805 = vunpack.c.l.b16 %v502
        %v806 = vunpack.c.l.b16 %v503
        %v807 = vunpack.c.l.b16 %v504
        %v808 = vunpack.c.l.b16 %v505
        %v809 = vunpack.c.l.b16 %v506
        %v810 = vunpack.c.l.b16 %v507
        %v811 = vunpack.c.l.b16 %v508
        %v812 = vunpack.c.l.b16 %v509
        %v813 = vunpack.c.l.b16 %v510
        %v814 = vunpack.c.l.b16 %v511
        %v815 = vunpack.c.l.b16 %v512
        %v816 = vunpack.c.l.b16 %v513
        %v817 = vunpack.c.l.b16 %v514
        %v818 = vunpack.c.l.b16 %v515
        %v819 = vunpack.c.l.b16 %v516
        %v820 = vunpack.c.l.b16 %v517
        %v821 = vunpack.c.l.b16 %v518
        %v822 = vunpack.c.l.b16 %v519
        %v823 = vpack.c.b16 %v696, %v695
        %v824 = vpack.c.b16 %v698, %v697
        %v825 = vpack.c.b16 %v700, %v699
        %v826 = vpack.c.b16 %v702, %v701
        %v827 = vpack.c.b16 %v704, %v703
        %v828 = vpack.c.b16 %v706, %v705
        %v829 = vpack.c.b16 %v708, %v707
        %v830 = vpack.c.b16 %v710, %v709
        %v831 = vpack.c.b16 %v712, %v711
        %v832 = vpack.c.b16 %v714, %v713
        %v833 = vpack.c.b16 %v716, %v715
        %v834 = vpack.c.b16 %v718, %v717
        %v835 = vpack.c.b16 %v720, %v719
        %v836 = vpack.c.b16 %v722, %v721
        %v837 = vpack.c.b16 %v724, %v723
        %v838 = vpack.c.b16 %v726, %v725
        %v839 = vpack.c.b16 %v728, %v727
        %v840 = vpack.c.b16 %v730, %v729
        %v841 = vpack.c.b16 %v732, %v731
        %v842 = vpack.c.b16 %v734, %v733
        %v843 = vpack.c.b16 %v736, %v735
        %v844 = vpack.c.b16 %v738, %v737
        %v845 = vpack.c.b16 %v740, %v739
        %v846 = vpack.c.b16 %v742, %v741
        %v847 = vpack.c.b16 %v744, %v743
        %v848 = vpack.c.b16 %v746, %v745
        %v849 = vpack.c.b16 %v748, %v747
        %v850 = vpack.c.b16 %v750, %v749
        %v851 = vpack.c.b16 %v752, %v751
        %v852 = vpack.c.b16 %v754, %v753
        %v853 = vpack.c.b16 %v756, %v755
        %v854 = vpack.c.b16 %v758, %v757
        %v855 = vpack.c.b16 %v760, %v759
        %v856 = vpack.c.b16 %v762, %v761
        %v857 = vpack.c.b16 %v764, %v763
        %v858 = vpack.c.b16 %v766, %v765
        %v859 = vpack.c.b16 %v768, %v767
        %v860 = vpack.c.b16 %v770, %v769
        %v861 = vpack.c.b16 %v772, %v771
        %v862 = vpack.c.b16 %v774, %v773
        %v863 = vpack.c.b16 %v776, %v775
        %v864 = vpack.c.b16 %v778, %v777
        %v865 = vpack.c.b16 %v780, %v779
        %v866 = vpack.c.b16 %v782, %v781
        %v867 = vpack.c.b16 %v784, %v783
        %v868 = vpack.c.b16 %v786, %v785
        %v869 = vpack.c.b16 %v788, %v787
        %v870 = vpack.c.b16 %v790, %v789
        %v871 = vpack.c.b16 %v792, %v791
        %v872 = vpack.c.b16 %v794, %v793
        %v873 = vpack.c.b16 %v796, %v795
        %v874 = vpack.c.b16 %v798, %v797
        %v875 = vpack.c.b16 %v800, %v799
        %v876 = vpack.c.b16 %v802, %v801
        %v877 = vpack.c.b16 %v804, %v803
        %v878 = vpack.c.b16 %v806, %v805
        %v879 = vpack.c.b16 %v808, %v807
        %v880 = vpack.c.b16 %v810, %v809
        %v881 = vpack.c.b16 %v812, %v811
        %v882 = vpack.c.b16 %v814, %v813
        %v883 = vpack.c.b16 %v816, %v815
        %v884 = vpack.c.b16 %v818, %v817
        %v885 = vpack.c.b16 %v820, %v819
        %v886 = vpack.c.b16 %v822, %v821
        %951 = vmatprep.subr.bf16.mxu0 0
        %952 = vmatpush1.bf16.msra.mxu0 %v830
        %953 = vmatprep.subr.bf16.mxu0 0
        %954 = vmatpush1.bf16.msra.mxu0 %v829
        %955 = vmatprep.subr.bf16.mxu0 0
        %956 = vmatpush1.bf16.msra.mxu0 %v828
        %957 = vmatprep.subr.bf16.mxu0 0
        %958 = vmatpush1.bf16.msra.mxu0 %v827
        %959 = vmatprep.subr.bf16.mxu0 0
        %960 = vmatpush1.bf16.msra.mxu0 %v826
        %961 = vmatprep.subr.bf16.mxu0 0
        %962 = vmatpush1.bf16.msra.mxu0 %v825
        %963 = vmatprep.subr.bf16.mxu0 0
        %964 = vmatpush1.bf16.msra.mxu0 %v824
        %965 = vmatprep.subr.bf16.mxu0 0
        %966 = vmatpush1.bf16.msra.mxu0 %v823
        %967 = vmatprep.subr.bf16.mxu0 0
        %968 = vmatpush2.bf16.msra.mxu0 %v838
        %969 = vmatprep.subr.bf16.mxu0 0
        %970 = vmatpush2.bf16.msra.mxu0 %v837
        %971 = vmatprep.subr.bf16.mxu0 0
        %972 = vmatpush2.bf16.msra.mxu0 %v836
        %973 = vmatprep.subr.bf16.mxu0 0
        %974 = vmatpush2.bf16.msra.mxu0 %v835
        %975 = vmatprep.subr.bf16.mxu0 0
        %976 = vmatpush2.bf16.msra.mxu0 %v834
        %977 = vmatprep.subr.bf16.mxu0 0
        %978 = vmatpush2.bf16.msra.mxu0 %v833
        %979 = vmatprep.subr.bf16.mxu0 0
        %980 = vmatpush2.bf16.msra.mxu0 %v832
        %981 = vmatprep.subr.bf16.mxu0 0
        %982 = vmatpush2.bf16.msra.mxu0 %v831
        %983 = vmatprep.mubr.bf16.mxu0 %v552
        %984 = vmatmul.mubr.bf16.gmra.mxu0 %v551
        %v985 = vpop.f32.mrf.mxu0
        %v986 = vadd.f32 %v525, %v985
        %v987 = vpop.f32.mrf.mxu0
        %v988 = vpop.f32.mrf.mxu0
        %v989 = vadd.f32 %v525, %v988
        %v990 = vpop.f32.mrf.mxu0
        %991 = vdwg.mxu0
        %992 = vmatprep.subr.bf16.mxu0 0
        %993 = vmatpush1.bf16.msra.mxu0 %v846
        %994 = vmatprep.subr.bf16.mxu0 0
        %995 = vmatpush1.bf16.msra.mxu0 %v845
        %996 = vmatprep.subr.bf16.mxu0 0
        %997 = vmatpush1.bf16.msra.mxu0 %v844
        %998 = vmatprep.subr.bf16.mxu0 0
        %999 = vmatpush1.bf16.msra.mxu0 %v843
        %1000 = vmatprep.subr.bf16.mxu0 0
        %1001 = vmatpush1.bf16.msra.mxu0 %v842
        %1002 = vmatprep.subr.bf16.mxu0 0
        %1003 = vmatpush1.bf16.msra.mxu0 %v841
        %1004 = vmatprep.subr.bf16.mxu0 0
        %1005 = vmatpush1.bf16.msra.mxu0 %v840
        %1006 = vmatprep.subr.bf16.mxu0 0
        %1007 = vmatpush1.bf16.msra.mxu0 %v839
        %1008 = vmatprep.subr.bf16.mxu0 0
        %1009 = vmatpush2.bf16.msra.mxu0 %v854
        %1010 = vmatprep.subr.bf16.mxu0 0
        %1011 = vmatpush2.bf16.msra.mxu0 %v853
        %1012 = vmatprep.subr.bf16.mxu0 0
        %1013 = vmatpush2.bf16.msra.mxu0 %v852
        %1014 = vmatprep.subr.bf16.mxu0 0
        %1015 = vmatpush2.bf16.msra.mxu0 %v851
        %1016 = vmatprep.subr.bf16.mxu0 0
        %1017 = vmatpush2.bf16.msra.mxu0 %v850
        %1018 = vmatprep.subr.bf16.mxu0 0
        %1019 = vmatpush2.bf16.msra.mxu0 %v849
        %1020 = vmatprep.subr.bf16.mxu0 0
        %1021 = vmatpush2.bf16.msra.mxu0 %v848
        %1022 = vmatprep.subr.bf16.mxu0 0
        %1023 = vmatpush2.bf16.msra.mxu0 %v847
        %1024 = vmatprep.mubr.bf16.mxu0 %v554
        %1025 = vmatmul.mubr.bf16.gmra.mxu0 %v553
        %v1026 = vpop.f32.mrf.mxu0
        %v1027 = vadd.f32 %v986, %v1026
        %v1028 = vpop.f32.mrf.mxu0
        %v1029 = vpop.f32.mrf.mxu0
        %v1030 = vadd.f32 %v989, %v1029
        %v1031 = vpop.f32.mrf.mxu0
        %1032 = vdwg.mxu0
        %1033 = vmatprep.subr.bf16.mxu0 0
        %1034 = vmatpush1.bf16.msra.mxu0 %v862
        %1035 = vmatprep.subr.bf16.mxu0 0
        %1036 = vmatpush1.bf16.msra.mxu0 %v861
        %1037 = vmatprep.subr.bf16.mxu0 0
        %1038 = vmatpush1.bf16.msra.mxu0 %v860
        %1039 = vmatprep.subr.bf16.mxu0 0
        %1040 = vmatpush1.bf16.msra.mxu0 %v859
        %1041 = vmatprep.subr.bf16.mxu0 0
        %1042 = vmatpush1.bf16.msra.mxu0 %v858
        %1043 = vmatprep.subr.bf16.mxu0 0
        %1044 = vmatpush1.bf16.msra.mxu0 %v857
        %1045 = vmatprep.subr.bf16.mxu0 0
        %1046 = vmatpush1.bf16.msra.mxu0 %v856
        %1047 = vmatprep.subr.bf16.mxu0 0
        %1048 = vmatpush1.bf16.msra.mxu0 %v855
        %1049 = vmatprep.subr.bf16.mxu0 0
        %1050 = vmatpush2.bf16.msra.mxu0 %v870
        %1051 = vmatprep.subr.bf16.mxu0 0
        %1052 = vmatpush2.bf16.msra.mxu0 %v869
        %1053 = vmatprep.subr.bf16.mxu0 0
        %1054 = vmatpush2.bf16.msra.mxu0 %v868
        %1055 = vmatprep.subr.bf16.mxu0 0
        %1056 = vmatpush2.bf16.msra.mxu0 %v867
        %1057 = vmatprep.subr.bf16.mxu0 0
        %1058 = vmatpush2.bf16.msra.mxu0 %v866
        %1059 = vmatprep.subr.bf16.mxu0 0
        %1060 = vmatpush2.bf16.msra.mxu0 %v865
        %1061 = vmatprep.subr.bf16.mxu0 0
        %1062 = vmatpush2.bf16.msra.mxu0 %v864
        %1063 = vmatprep.subr.bf16.mxu0 0
        %1064 = vmatpush2.bf16.msra.mxu0 %v863
        %1065 = vmatprep.mubr.bf16.mxu0 %v556
        %1066 = vmatmul.mubr.bf16.gmra.mxu0 %v555
        %v1067 = vpop.f32.mrf.mxu0
        %v1068 = vadd.f32 %v1027, %v1067
        %v1069 = vpop.f32.mrf.mxu0
        %v1070 = vpop.f32.mrf.mxu0
        %v1071 = vadd.f32 %v1030, %v1070
        %v1072 = vpop.f32.mrf.mxu0
        %1073 = vdwg.mxu0
        %1074 = vmatprep.subr.bf16.mxu0 0
        %1075 = vmatpush1.bf16.msra.mxu0 %v878
        %1076 = vmatprep.subr.bf16.mxu0 0
        %1077 = vmatpush1.bf16.msra.mxu0 %v877
        %1078 = vmatprep.subr.bf16.mxu0 0
        %1079 = vmatpush1.bf16.msra.mxu0 %v876
        %1080 = vmatprep.subr.bf16.mxu0 0
        %1081 = vmatpush1.bf16.msra.mxu0 %v875
        %1082 = vmatprep.subr.bf16.mxu0 0
        %1083 = vmatpush1.bf16.msra.mxu0 %v874
        %1084 = vmatprep.subr.bf16.mxu0 0
        %1085 = vmatpush1.bf16.msra.mxu0 %v873
        %1086 = vmatprep.subr.bf16.mxu0 0
        %1087 = vmatpush1.bf16.msra.mxu0 %v872
        %1088 = vmatprep.subr.bf16.mxu0 0
        %1089 = vmatpush1.bf16.msra.mxu0 %v871
        %1090 = vmatprep.subr.bf16.mxu0 0
        %1091 = vmatpush2.bf16.msra.mxu0 %v886
        %1092 = vmatprep.subr.bf16.mxu0 0
        %1093 = vmatpush2.bf16.msra.mxu0 %v885
        %1094 = vmatprep.subr.bf16.mxu0 0
        %1095 = vmatpush2.bf16.msra.mxu0 %v884
        %1096 = vmatprep.subr.bf16.mxu0 0
        %1097 = vmatpush2.bf16.msra.mxu0 %v883
        %1098 = vmatprep.subr.bf16.mxu0 0
        %1099 = vmatpush2.bf16.msra.mxu0 %v882
        %1100 = vmatprep.subr.bf16.mxu0 0
        %1101 = vmatpush2.bf16.msra.mxu0 %v881
        %1102 = vmatprep.subr.bf16.mxu0 0
        %1103 = vmatpush2.bf16.msra.mxu0 %v880
        %1104 = vmatprep.subr.bf16.mxu0 0
        %1105 = vmatpush2.bf16.msra.mxu0 %v879
        %1106 = vmatprep.mubr.bf16.mxu0 %v558
        %1107 = vmatmul.mubr.bf16.gmra.mxu0 %v557
        %v1108 = vpop.f32.mrf.mxu0
        %v1109 = vadd.f32 %v1068, %v1108
        %v1110 = vpop.f32.mrf.mxu0
        %v1111 = vpop.f32.mrf.mxu0
        %v1112 = vadd.f32 %v1071, %v1111
        %v1113 = vpop.f32.mrf.mxu0
        %1114 = vdwg.mxu0
        %v1115 = vmax.f32 %v1109, 0.0
        %v1116 = vmax.f32 %v1112, 0.0
        %v1117 = vld [vmem:[%s336] sm:$0xf]
        %v1118 = vld [vmem:[%s336 + $0x4] sm:$0xf]
        %v1119 = vld [vmem:[%s336 + $0x8] sm:$0xf]
        %v1120 = vld [vmem:[%s336 + $0xc] sm:$0xf]
        %v1121 = vld [vmem:[%s336 + $0x10] sm:$0xf]
        %v1122 = vld [vmem:[%s336 + $0x14] sm:$0xf]
        %v1123 = vld [vmem:[%s336 + $0x18] sm:$0xf]
        %v1124 = vld [vmem:[%s336 + $0x1c] sm:$0xf]
        %v1125 = vld [vmem:[%s336 + $0x20] sm:$0xf]
        %v1126 = vld [vmem:[%s336 + $0x24] sm:$0xf]
        %v1127 = vld [vmem:[%s336 + $0x28] sm:$0xf]
        %v1128 = vld [vmem:[%s336 + $0x2c] sm:$0xf]
        %v1129 = vld [vmem:[%s336 + $0x30] sm:$0xf]
        %v1130 = vld [vmem:[%s336 + $0x34] sm:$0xf]
        %v1131 = vld [vmem:[%s336 + $0x38] sm:$0xf]
        %v1132 = vld [vmem:[%s336 + $0x3c] sm:$0xf]
        %v1133 = vunpack.c.l.bf16 %v1117
        %v1134 = vunpack.c.l.bf16 %v1118
        %v1135 = vunpack.c.l.bf16 %v1119
        %v1136 = vunpack.c.l.bf16 %v1120
        %v1137 = vunpack.c.l.bf16 %v1121
        %v1138 = vunpack.c.l.bf16 %v1122
        %v1139 = vunpack.c.l.bf16 %v1123
        %v1140 = vunpack.c.l.bf16 %v1124
        %v1141 = vunpack.c.l.bf16 %v1125
        %v1142 = vunpack.c.l.bf16 %v1126
        %v1143 = vunpack.c.l.bf16 %v1127
        %v1144 = vunpack.c.l.bf16 %v1128
        %v1145 = vunpack.c.l.bf16 %v1129
        %v1146 = vunpack.c.l.bf16 %v1130
        %v1147 = vunpack.c.l.bf16 %v1131
        %v1148 = vunpack.c.l.bf16 %v1132
        %v1149 = vmul.f32 %v1133, %v1115
        %v1150 = vmul.f32 %v1134, %v1116
        %v1151 = vmul.f32 %v1135, %v1115
        %v1152 = vmul.f32 %v1136, %v1116
        %v1153 = vmul.f32 %v1137, %v1115
        %v1154 = vmul.f32 %v1138, %v1116
        %v1155 = vmul.f32 %v1139, %v1115
        %v1156 = vmul.f32 %v1140, %v1116
        %v1157 = vmul.f32 %v1141, %v1115
        %v1158 = vmul.f32 %v1142, %v1116
        %v1159 = vmul.f32 %v1143, %v1115
        %v1160 = vmul.f32 %v1144, %v1116
        %v1161 = vmul.f32 %v1145, %v1115
        %v1162 = vmul.f32 %v1146, %v1116
        %v1163 = vmul.f32 %v1147, %v1115
        %v1164 = vmul.f32 %v1148, %v1116
        %v1165 = vpack.c.bf16 %v1150, %v1149
        %v1166 = vpack.c.bf16 %v1152, %v1151
        %v1167 = vpack.c.bf16 %v1154, %v1153
        %v1168 = vpack.c.bf16 %v1156, %v1155
        %v1169 = vpack.c.bf16 %v1158, %v1157
        %v1170 = vpack.c.bf16 %v1160, %v1159
        %v1171 = vpack.c.bf16 %v1162, %v1161
        %v1172 = vpack.c.bf16 %v1164, %v1163
        %v1173 = vld [vmem:[%s3] sm:$0xf]
        %v1174 = vld [vmem:[%s3 + $0x4] sm:$0xf]
        %v1175 = vld [vmem:[%s3 + $0x8] sm:$0xf]
        %v1176 = vld [vmem:[%s3 + $0xc] sm:$0xf]
        %v1177 = vld [vmem:[%s3 + $0x10] sm:$0xf]
        %v1178 = vld [vmem:[%s3 + $0x14] sm:$0xf]
        %v1179 = vld [vmem:[%s3 + $0x18] sm:$0xf]
        %v1180 = vld [vmem:[%s3 + $0x1c] sm:$0xf]
        %v1181 = vld [vmem:[%s3 + $0x20] sm:$0xf]
        %v1182 = vld [vmem:[%s3 + $0x24] sm:$0xf]
        %v1183 = vld [vmem:[%s3 + $0x28] sm:$0xf]
        %v1184 = vld [vmem:[%s3 + $0x2c] sm:$0xf]
        %v1185 = vld [vmem:[%s3 + $0x30] sm:$0xf]
        %v1186 = vld [vmem:[%s3 + $0x34] sm:$0xf]
        %v1187 = vld [vmem:[%s3 + $0x38] sm:$0xf]
        %v1188 = vld [vmem:[%s3 + $0x3c] sm:$0xf]
        %v1189 = vld [vmem:[%s4] sm:$0x1]
        %v1191 = vlaneseq
        %v1192 = vshrl.u32 %v1191, 7
        %v1193 = vsub.s32 0, %v1192
        %v1194 = vrot.slane %v1189, %v1193
        %v1212 = vunpack.c.l.b16 %v1173
        %v1213 = vunpack.c.l.b16 %v1174
        %v1214 = vunpack.c.l.b16 %v1175
        %v1215 = vunpack.c.l.b16 %v1176
        %v1216 = vunpack.c.l.b16 %v1177
        %v1217 = vunpack.c.l.b16 %v1178
        %v1218 = vunpack.c.l.b16 %v1179
        %v1219 = vunpack.c.l.b16 %v1180
        %v1220 = vunpack.c.l.b16 %v1181
        %v1221 = vunpack.c.l.b16 %v1182
        %v1222 = vunpack.c.l.b16 %v1183
        %v1223 = vunpack.c.l.b16 %v1184
        %v1224 = vunpack.c.l.b16 %v1185
        %v1225 = vunpack.c.l.b16 %v1186
        %v1226 = vunpack.c.l.b16 %v1187
        %v1227 = vunpack.c.l.b16 %v1188
        %v1228 = vpack.c.b16 %v1213, %v1212
        %v1229 = vpack.c.b16 %v1215, %v1214
        %v1230 = vpack.c.b16 %v1217, %v1216
        %v1231 = vpack.c.b16 %v1219, %v1218
        %v1232 = vpack.c.b16 %v1221, %v1220
        %v1233 = vpack.c.b16 %v1223, %v1222
        %v1234 = vpack.c.b16 %v1225, %v1224
        %v1235 = vpack.c.b16 %v1227, %v1226
        %1244 = vmatprep.subr.bf16.mxu0 0
        %1245 = vmatpush1.bf16.msra.mxu0 %v1235
        %1246 = vmatprep.subr.bf16.mxu0 0
        %1247 = vmatpush1.bf16.msra.mxu0 %v1234
        %1248 = vmatprep.subr.bf16.mxu0 0
        %1249 = vmatpush1.bf16.msra.mxu0 %v1233
        %1250 = vmatprep.subr.bf16.mxu0 0
        %1251 = vmatpush1.bf16.msra.mxu0 %v1232
        %1252 = vmatprep.subr.bf16.mxu0 0
        %1253 = vmatpush1.bf16.msra.mxu0 %v1231
        %1254 = vmatprep.subr.bf16.mxu0 0
        %1255 = vmatpush1.bf16.msra.mxu0 %v1230
        %1256 = vmatprep.subr.bf16.mxu0 0
        %1257 = vmatpush1.bf16.msra.mxu0 %v1229
        %1258 = vmatprep.subr.bf16.mxu0 0
        %1259 = vmatpush1.bf16.msra.mxu0 %v1228
        %1260 = vmatprep.subr.bf16.mxu0 0
        %1261 = vmatpush2.bf16.msra.mxu0 0
        %1262 = vmatprep.subr.bf16.mxu0 0
        %1263 = vmatpush2.bf16.msra.mxu0 0
        %1264 = vmatprep.subr.bf16.mxu0 0
        %1265 = vmatpush2.bf16.msra.mxu0 0
        %1266 = vmatprep.subr.bf16.mxu0 0
        %1267 = vmatpush2.bf16.msra.mxu0 0
        %1268 = vmatprep.subr.bf16.mxu0 0
        %1269 = vmatpush2.bf16.msra.mxu0 0
        %1270 = vmatprep.subr.bf16.mxu0 0
        %1271 = vmatpush2.bf16.msra.mxu0 0
        %1272 = vmatprep.subr.bf16.mxu0 0
        %1273 = vmatpush2.bf16.msra.mxu0 0
        %1274 = vmatprep.subr.bf16.mxu0 0
        %1275 = vmatpush2.bf16.msra.mxu0 0
        %1276 = vmatprep.mubr.bf16.mxu0 0
        %1277 = vmatmul.mubr.bf16.gmra.mxu0 %v1165
        %v1278 = vpop.f32.mrf.mxu0
        %v1279 = vadd.f32 %v1194, %v1278
        %v1280 = vpop.f32.mrf.mxu0
        %v1281 = vpop.f32.mrf.mxu0
        %v1282 = vadd.f32 %v1194, %v1281
        %v1283 = vpop.f32.mrf.mxu0
        %1284 = vmatprep.mubr.bf16.mxu0 0
        %1285 = vmatmul.mubr.bf16.gmra.mxu0 %v1166
        %v1286 = vpop.f32.mrf.mxu0
        %v1287 = vadd.f32 %v1194, %v1286
        %v1288 = vpop.f32.mrf.mxu0
        %v1289 = vpop.f32.mrf.mxu0
        %v1290 = vadd.f32 %v1194, %v1289
        %v1291 = vpop.f32.mrf.mxu0
        %1292 = vmatprep.mubr.bf16.mxu0 0
        %1293 = vmatmul.mubr.bf16.gmra.mxu0 %v1167
        %v1294 = vpop.f32.mrf.mxu0
        %v1295 = vadd.f32 %v1194, %v1294
        %v1296 = vpop.f32.mrf.mxu0
        %v1297 = vpop.f32.mrf.mxu0
        %v1298 = vadd.f32 %v1194, %v1297
        %v1299 = vpop.f32.mrf.mxu0
        %1300 = vmatprep.mubr.bf16.mxu0 0
        %1301 = vmatmul.mubr.bf16.gmra.mxu0 %v1168
        %v1302 = vpop.f32.mrf.mxu0
        %v1303 = vadd.f32 %v1194, %v1302
        %v1304 = vpop.f32.mrf.mxu0
        %v1305 = vpop.f32.mrf.mxu0
        %v1306 = vadd.f32 %v1194, %v1305
        %v1307 = vpop.f32.mrf.mxu0
        %1308 = vmatprep.mubr.bf16.mxu0 0
        %1309 = vmatmul.mubr.bf16.gmra.mxu0 %v1169
        %v1310 = vpop.f32.mrf.mxu0
        %v1311 = vadd.f32 %v1194, %v1310
        %v1312 = vpop.f32.mrf.mxu0
        %v1313 = vpop.f32.mrf.mxu0
        %v1314 = vadd.f32 %v1194, %v1313
        %v1315 = vpop.f32.mrf.mxu0
        %1316 = vmatprep.mubr.bf16.mxu0 0
        %1317 = vmatmul.mubr.bf16.gmra.mxu0 %v1170
        %v1318 = vpop.f32.mrf.mxu0
        %v1319 = vadd.f32 %v1194, %v1318
        %v1320 = vpop.f32.mrf.mxu0
        %v1321 = vpop.f32.mrf.mxu0
        %v1322 = vadd.f32 %v1194, %v1321
        %v1323 = vpop.f32.mrf.mxu0
        %1324 = vmatprep.mubr.bf16.mxu0 0
        %1325 = vmatmul.mubr.bf16.gmra.mxu0 %v1171
        %v1326 = vpop.f32.mrf.mxu0
        %v1327 = vadd.f32 %v1194, %v1326
        %v1328 = vpop.f32.mrf.mxu0
        %v1329 = vpop.f32.mrf.mxu0
        %v1330 = vadd.f32 %v1194, %v1329
        %v1331 = vpop.f32.mrf.mxu0
        %1332 = vmatprep.mubr.bf16.mxu0 0
        %1333 = vmatmul.mubr.bf16.gmra.mxu0 %v1172
        %v1334 = vpop.f32.mrf.mxu0
        %v1335 = vadd.f32 %v1194, %v1334
        %v1336 = vpop.f32.mrf.mxu0
        %v1337 = vpop.f32.mrf.mxu0
        %v1338 = vadd.f32 %v1194, %v1337
        %v1339 = vpop.f32.mrf.mxu0
        %1340 = vdwg.mxu0
        %vm1341 = vcmask 130048
        %v1342 = vsel %vm1341, %v1279, -inf
        %1343 = vmax.xlane.f32.xlu0 %v1342
        %v1344 = vpop.xlane.xlu0 %1343
        %v1345 = vsel %vm1341, %v1282, -inf
        %1346 = vmax.xlane.f32.xlu0 %v1345
        %v1347 = vpop.xlane.xlu0 %1346
        %v1348 = vsel %vm1341, %v1287, -inf
        %1349 = vmax.xlane.f32.xlu0 %v1348
        %v1350 = vpop.xlane.xlu0 %1349
        %v1351 = vsel %vm1341, %v1290, -inf
        %1352 = vmax.xlane.f32.xlu0 %v1351
        %v1353 = vpop.xlane.xlu0 %1352
        %v1354 = vsel %vm1341, %v1295, -inf
        %1355 = vmax.xlane.f32.xlu0 %v1354
        %v1356 = vpop.xlane.xlu0 %1355
        %v1357 = vsel %vm1341, %v1298, -inf
        %1358 = vmax.xlane.f32.xlu0 %v1357
        %v1359 = vpop.xlane.xlu0 %1358
        %v1360 = vsel %vm1341, %v1303, -inf
        %1361 = vmax.xlane.f32.xlu0 %v1360
        %v1362 = vpop.xlane.xlu0 %1361
        %v1363 = vsel %vm1341, %v1306, -inf
        %1364 = vmax.xlane.f32.xlu0 %v1363
        %v1365 = vpop.xlane.xlu0 %1364
        %v1366 = vsel %vm1341, %v1311, -inf
        %1367 = vmax.xlane.f32.xlu0 %v1366
        %v1368 = vpop.xlane.xlu0 %1367
        %v1369 = vsel %vm1341, %v1314, -inf
        %1370 = vmax.xlane.f32.xlu0 %v1369
        %v1371 = vpop.xlane.xlu0 %1370
        %v1372 = vsel %vm1341, %v1319, -inf
        %1373 = vmax.xlane.f32.xlu0 %v1372
        %v1374 = vpop.xlane.xlu0 %1373
        %v1375 = vsel %vm1341, %v1322, -inf
        %1376 = vmax.xlane.f32.xlu0 %v1375
        %v1377 = vpop.xlane.xlu0 %1376
        %v1378 = vsel %vm1341, %v1327, -inf
        %1379 = vmax.xlane.f32.xlu0 %v1378
        %v1380 = vpop.xlane.xlu0 %1379
        %v1381 = vsel %vm1341, %v1330, -inf
        %1382 = vmax.xlane.f32.xlu0 %v1381
        %v1383 = vpop.xlane.xlu0 %1382
        %v1384 = vsel %vm1341, %v1335, -inf
        %1385 = vmax.xlane.f32.xlu0 %v1384
        %v1386 = vpop.xlane.xlu0 %1385
        %v1387 = vsel %vm1341, %v1338, -inf
        %1388 = vmax.xlane.f32.xlu0 %v1387
        %v1389 = vpop.xlane.xlu0 %1388
        %v1390 = vsub.f32 %v1279, %v1344
        %v1391 = vsub.f32 %v1282, %v1347
        %v1392 = vsub.f32 %v1287, %v1350
        %v1393 = vsub.f32 %v1290, %v1353
        %v1394 = vsub.f32 %v1295, %v1356
        %v1395 = vsub.f32 %v1298, %v1359
        %v1396 = vsub.f32 %v1303, %v1362
        %v1397 = vsub.f32 %v1306, %v1365
        %v1398 = vsub.f32 %v1311, %v1368
        %v1399 = vsub.f32 %v1314, %v1371
        %v1400 = vsub.f32 %v1319, %v1374
        %v1401 = vsub.f32 %v1322, %v1377
        %v1402 = vsub.f32 %v1327, %v1380
        %v1403 = vsub.f32 %v1330, %v1383
        %v1404 = vsub.f32 %v1335, %v1386
        %v1405 = vsub.f32 %v1338, %v1389
        %v1406 = vmul.f32 %v1390, 1.442695
        %v1407 = vpow.pop %v1406
        %v1408 = vmul.f32 %v1391, 1.442695
        %v1409 = vpow.pop %v1408
        %v1410 = vmul.f32 %v1392, 1.442695
        %v1411 = vpow.pop %v1410
        %v1412 = vmul.f32 %v1393, 1.442695
        %v1413 = vpow.pop %v1412
        %v1414 = vmul.f32 %v1394, 1.442695
        %v1415 = vpow.pop %v1414
        %v1416 = vmul.f32 %v1395, 1.442695
        %v1417 = vpow.pop %v1416
        %v1418 = vmul.f32 %v1396, 1.442695
        %v1419 = vpow.pop %v1418
        %v1420 = vmul.f32 %v1397, 1.442695
        %v1421 = vpow.pop %v1420
        %v1422 = vmul.f32 %v1398, 1.442695
        %v1423 = vpow.pop %v1422
        %v1424 = vmul.f32 %v1399, 1.442695
        %v1425 = vpow.pop %v1424
        %v1426 = vmul.f32 %v1400, 1.442695
        %v1427 = vpow.pop %v1426
        %v1428 = vmul.f32 %v1401, 1.442695
        %v1429 = vpow.pop %v1428
        %v1430 = vmul.f32 %v1402, 1.442695
        %v1431 = vpow.pop %v1430
        %v1432 = vmul.f32 %v1403, 1.442695
        %v1433 = vpow.pop %v1432
        %v1434 = vmul.f32 %v1404, 1.442695
        %v1435 = vpow.pop %v1434
        %v1436 = vmul.f32 %v1405, 1.442695
        %v1437 = vpow.pop %v1436
        %v1438 = vsel %vm1341, %v1407, 0.0
        %1439 = vadd.xlane.f32.xlu0 %v1438
        %v1440 = vpop.xlane.xlu0 %1439
        %v1441 = vsel %vm1341, %v1409, 0.0
        %1442 = vadd.xlane.f32.xlu0 %v1441
        %v1443 = vpop.xlane.xlu0 %1442
        %v1444 = vsel %vm1341, %v1411, 0.0
        %1445 = vadd.xlane.f32.xlu0 %v1444
        %v1446 = vpop.xlane.xlu0 %1445
        %v1447 = vsel %vm1341, %v1413, 0.0
        %1448 = vadd.xlane.f32.xlu0 %v1447
        %v1449 = vpop.xlane.xlu0 %1448
        %v1450 = vsel %vm1341, %v1415, 0.0
        %1451 = vadd.xlane.f32.xlu0 %v1450
        %v1452 = vpop.xlane.xlu0 %1451
        %v1453 = vsel %vm1341, %v1417, 0.0
        %1454 = vadd.xlane.f32.xlu0 %v1453
        %v1455 = vpop.xlane.xlu0 %1454
        %v1456 = vsel %vm1341, %v1419, 0.0
        %1457 = vadd.xlane.f32.xlu0 %v1456
        %v1458 = vpop.xlane.xlu0 %1457
        %v1459 = vsel %vm1341, %v1421, 0.0
        %1460 = vadd.xlane.f32.xlu0 %v1459
        %v1461 = vpop.xlane.xlu0 %1460
        %v1462 = vsel %vm1341, %v1423, 0.0
        %1463 = vadd.xlane.f32.xlu0 %v1462
        %v1464 = vpop.xlane.xlu0 %1463
        %v1465 = vsel %vm1341, %v1425, 0.0
        %1466 = vadd.xlane.f32.xlu0 %v1465
        %v1467 = vpop.xlane.xlu0 %1466
        %v1468 = vsel %vm1341, %v1427, 0.0
        %1469 = vadd.xlane.f32.xlu0 %v1468
        %v1470 = vpop.xlane.xlu0 %1469
        %v1471 = vsel %vm1341, %v1429, 0.0
        %1472 = vadd.xlane.f32.xlu0 %v1471
        %v1473 = vpop.xlane.xlu0 %1472
        %v1474 = vsel %vm1341, %v1431, 0.0
        %1475 = vadd.xlane.f32.xlu0 %v1474
        %v1476 = vpop.xlane.xlu0 %1475
        %v1477 = vsel %vm1341, %v1433, 0.0
        %1478 = vadd.xlane.f32.xlu0 %v1477
        %v1479 = vpop.xlane.xlu0 %1478
        %v1480 = vsel %vm1341, %v1435, 0.0
        %1481 = vadd.xlane.f32.xlu0 %v1480
        %v1482 = vpop.xlane.xlu0 %1481
        %v1483 = vsel %vm1341, %v1437, 0.0
        %1484 = vadd.xlane.f32.xlu0 %v1483
        %v1485 = vpop.xlane.xlu0 %1484
        %v1486 = vrcp.pop %v1440
        %v1487 = vmul.f32 %v1407, %v1486
        %v1488 = vrcp.pop %v1443
        %v1489 = vmul.f32 %v1409, %v1488
        %v1490 = vrcp.pop %v1446
        %v1491 = vmul.f32 %v1411, %v1490
        %v1492 = vrcp.pop %v1449
        %v1493 = vmul.f32 %v1413, %v1492
        %v1494 = vrcp.pop %v1452
        %v1495 = vmul.f32 %v1415, %v1494
        %v1496 = vrcp.pop %v1455
        %v1497 = vmul.f32 %v1417, %v1496
        %v1498 = vrcp.pop %v1458
        %v1499 = vmul.f32 %v1419, %v1498
        %v1500 = vrcp.pop %v1461
        %v1501 = vmul.f32 %v1421, %v1500
        %v1502 = vrcp.pop %v1464
        %v1503 = vmul.f32 %v1423, %v1502
        %v1504 = vrcp.pop %v1467
        %v1505 = vmul.f32 %v1425, %v1504
        %v1506 = vrcp.pop %v1470
        %v1507 = vmul.f32 %v1427, %v1506
        %v1508 = vrcp.pop %v1473
        %v1509 = vmul.f32 %v1429, %v1508
        %v1510 = vrcp.pop %v1476
        %v1511 = vmul.f32 %v1431, %v1510
        %v1512 = vrcp.pop %v1479
        %v1513 = vmul.f32 %v1433, %v1512
        %v1514 = vrcp.pop %v1482
        %v1515 = vmul.f32 %v1435, %v1514
        %v1516 = vrcp.pop %v1485
        %v1517 = vmul.f32 %v1437, %v1516
        %v1518 = vsel %vm1341, %v1487, 0.0
        %v1519 = vsel %vm1341, %v1491, 0.0
        %v1520 = vadd.f32 %v1518, %v1519
        %v1521 = vsel %vm1341, %v1495, 0.0
        %v1522 = vadd.f32 %v1520, %v1521
        %v1523 = vsel %vm1341, %v1499, 0.0
        %v1524 = vadd.f32 %v1522, %v1523
        %v1525 = vsel %vm1341, %v1503, 0.0
        %v1526 = vadd.f32 %v1524, %v1525
        %v1527 = vsel %vm1341, %v1507, 0.0
        %v1528 = vadd.f32 %v1526, %v1527
        %v1529 = vsel %vm1341, %v1511, 0.0
        %v1530 = vadd.f32 %v1528, %v1529
        %v1531 = vsel %vm1341, %v1515, 0.0
        %v1532 = vadd.f32 %v1530, %v1531
        %v1533 = vsel %vm1341, %v1489, 0.0
        %v1534 = vsel %vm1341, %v1493, 0.0
        %v1535 = vadd.f32 %v1533, %v1534
        %v1536 = vsel %vm1341, %v1497, 0.0
        %v1537 = vadd.f32 %v1535, %v1536
        %v1538 = vsel %vm1341, %v1501, 0.0
        %v1539 = vadd.f32 %v1537, %v1538
        %v1540 = vsel %vm1341, %v1505, 0.0
        %v1541 = vadd.f32 %v1539, %v1540
        %v1542 = vsel %vm1341, %v1509, 0.0
        %v1543 = vadd.f32 %v1541, %v1542
        %v1544 = vsel %vm1341, %v1513, 0.0
        %v1545 = vadd.f32 %v1543, %v1544
        %v1546 = vsel %vm1341, %v1517, 0.0
        %v1547 = vadd.f32 %v1545, %v1546
        %v1548 = vlog2.pop %v1532
        %v1549 = vmul.f32 %v1548, 0.6931472
        %v1550 = vlog2.pop %v1547
        %v1551 = vmul.f32 %v1550, 0.6931472
        %v1552 = vsub.f32 %v1549, 2.0794415
        %v1553 = vsub.f32 %v1551, 2.0794415
        %1554 = vst.msk [vmem:[%s381] sm:$0xff] %vm1341, %v1552
        %1555 = vst.msk [vmem:[%s381 + $0x8] sm:$0xff] %vm1341, %v1553
        %s1556 = smul.u32 2, %s17
        %p1557 = scmp.lt.s32.totalorder %s1556, 3
        %s1558 = scalar_select %p1557, %s1556, 3
        %s1559 = smul.addr %s1558, 8
        %s1560 = scalar_lea.vmem %s6, %s1559
        // Predicated region
        $region86: #{sampler_model_forward.1} parent=80 // pred_check
          %p1561 = pneg %p171
        $region87: #{sampler_model_forward.1} parent=80 // pred_check_branch
          %1563 = sbr.rel (%p1561) target = $region89
        $region88: #{sampler_model_forward.1} parent=80 // pred_region
          %s1564 = smul.u32 2, %s17
        $region89: #{sampler_model_forward.1} parent=80 // pred_fallthru
          _
      $region81: #{sampler_model_forward.1} parent=5 // pred_fallthru
        _
      %p1565 = scmp.le.s32.totalorder 2, %s12
      // Predicated region
      $region90: #{sampler_model_forward.1} parent=5 // pred_check
        %p1566 = pneg %p1565
      $region91: #{sampler_model_forward.1} parent=5 // pred_check_branch
        %1568 = sbr.rel (%p1566) target = $region93
      $region92: #{sampler_model_forward.1} parent=5 // pred_region
        %s1569 = ssub.s32 %s12, 2
        // Predicated region
        $region94: #{sampler_model_forward.1} parent=92 // pred_check
          %p1570 = pneg %p177
        $region95: #{sampler_model_forward.1} parent=92 // pred_check_branch
          %1572 = sbr.rel (%p1570) target = $region97
        $region96: #{sampler_model_forward.1} parent=92 // pred_region
          %s1573 = smul.u32 2, %s18
          %p1574 = scmp.lt.s32.totalorder %s1573, 3
          %s1575 = scalar_select %p1574, %s1573, 3
          %s1576 = smul.addr %s1575, 8
          %s1577 = scalar_lea.vmem %s6, %s1576
        $region97: #{sampler_model_forward.1} parent=92 // pred_fallthru
          _
      $region93: #{sampler_model_forward.1} parent=5 // pred_fallthru
        _
    $region6: #{sampler_model_forward.1} parent=1 // loop_footer
      %s16 = sadd.s32 1, %s12
    $region7: #{sampler_model_forward.1} parent=1 // loop_footer_branch
      %11 = sbr.rel target = $region3
    $region8: #{sampler_model_forward.1} parent=1 // loop_exit
      _

</llo_original>
